<compile_context>
chip_gen: v7x
topology: tpu7x:2x2x1
jax: 0.10.0
libtpu: 0.0.40
codegen_flags: <defaults>
</compile_context>

<pallas_src>
import functools

import jax
import jax.numpy as jnp
import numpy as np
from jax import lax
from jax.experimental import pallas as pl
from jax.experimental.pallas import tpu as pltpu

EPS = 1e-5


def _bn_relu(h, gamma, beta):
    """Training-mode BatchNorm1d (batch stats, biased var) + ReLU, f32 math.

    Two-pass (centered) variance: mean first, then sum of centered squares.
    """
    inv_b = 1.0 / h.shape[0]
    mean = jnp.sum(h, axis=0, keepdims=True) * inv_b
    hc = h - mean
    var = jnp.sum(hc * hc, axis=0, keepdims=True) * inv_b
    scale = gamma * lax.rsqrt(var + EPS)          # rsqrt -> EUP slot
    return jnp.maximum(hc * scale + beta, 0.0)


def _expander_kernel(x_ref, w1_ref, g1_ref, be1_ref, w2_ref, g2_ref, be2_ref,
                     o_ref, h_ref):
    # ---- fc1 + bn1 + relu1: computed once, cached in bf16 VMEM for j > 0 ----
    # fc1 bias omitted: it cancels exactly inside training-mode BN (h - mean).
    @pl.when(pl.program_id(0) == 0)
    def _fc1():
        h = jnp.dot(x_ref[...].astype(jnp.bfloat16), w1_ref[...],
                    preferred_element_type=jnp.float32)
        h_ref[...] = _bn_relu(h, g1_ref[...], be1_ref[...]).astype(jnp.bfloat16)
    # dropout1: p = 0.0 -> identity (elided)

    # ---- fc2 tile + bn2 + relu2 (fc2 bias also cancels under BN) ----
    y = jnp.dot(h_ref[...], w2_ref[...], preferred_element_type=jnp.float32)
    o_ref[...] = _bn_relu(y, g2_ref[...], be2_ref[...]).astype(o_ref.dtype)
    # dropout2: p = 0.0 -> identity (elided)


@functools.partial(jax.jit, static_argnames=("tile_n", "out_dtype"))
def expander_forward(x, w1_t, g1, be1, w2_t, g2, be2, *,
                     tile_n=256, out_dtype=jnp.float32):
    """x: [B, Din] f32.  w*_t: [in, out] **bfloat16** (pre-transposed, cast once
    by the caller).  g*/be*: [1, out] f32 BN affine.  Linear biases are not
    inputs: followed by training-mode BatchNorm they cancel exactly.
    """
    B, d_in = x.shape
    d_hid = w1_t.shape[1]
    d_out = w2_t.shape[1]

    if w1_t.dtype != jnp.bfloat16 or w2_t.dtype != jnp.bfloat16:
        raise ValueError("pass fc1/fc2 weights pre-cast to bfloat16 "
                         "(cast once, outside the hot path)")

    tn = min(tile_n, d_out)
    if d_out % tn:
        raise ValueError("output dim must be a multiple of tile_n")
    grid = (d_out // tn,)   # j: output-feature tiles (sequential: h cache dep)

    # ---- VMEM budget (bytes): pipelined blocks are double-buffered ----
    f32b, bf16b = 4, 2
    outb = jnp.dtype(out_dtype).itemsize
    vmem_bytes = (
        2 * B * d_in * jnp.dtype(x.dtype).itemsize   # x block
        + 2 * d_in * d_hid * bf16b                   # w1 (whole, resident)
        + 2 * 2 * d_hid * f32b                       # bn1 gamma/beta
        + 2 * d_hid * tn * bf16b                     # w2 tile
        + 2 * 2 * tn * f32b                          # bn2 gamma/beta
        + 2 * B * tn * outb                          # out block
        + B * d_hid * bf16b                          # h scratch (single buffer)
    )
    if vmem_bytes > 30 * 1024 * 1024:                # 32 MiB scoped default, v7x-safe
        # TODO(synk): add a k-tiled (hidden-axis) fallback path with an f32
        # accumulator for problem sizes whose resident blocks exceed VMEM.
        raise ValueError(f"resident VMEM estimate {vmem_bytes} B exceeds budget; "
                         "hidden-axis tiling not implemented for this size")

    return pl.pallas_call(
        _expander_kernel,
        out_shape=jax.ShapeDtypeStruct((B, d_out), out_dtype),
        grid_spec=pltpu.PrefetchScalarGridSpec(
            num_scalar_prefetch=0,
            grid=grid,
            in_specs=[
                pl.BlockSpec((B, d_in), lambda j: (0, 0)),      # x (resident, f32)
                pl.BlockSpec((d_in, d_hid), lambda j: (0, 0)),  # w1 (resident, bf16)
                pl.BlockSpec((1, d_hid), lambda j: (0, 0)),     # bn1 gamma
                pl.BlockSpec((1, d_hid), lambda j: (0, 0)),     # bn1 beta
                pl.BlockSpec((d_hid, tn), lambda j: (0, j)),    # w2 tile (bf16)
                pl.BlockSpec((1, tn), lambda j: (0, j)),        # bn2 gamma
                pl.BlockSpec((1, tn), lambda j: (0, j)),        # bn2 beta
            ],
            out_specs=pl.BlockSpec((B, tn), lambda j: (0, j)),
            scratch_shapes=[pltpu.VMEM((B, d_hid), jnp.bfloat16)],  # cached h
        ),
        compiler_params=pltpu.CompilerParams(
            dimension_semantics=("arbitrary",)),   # j carries the h-cache dep
    )(x, w1_t, g1, be1, w2_t, g2, be2)


def _reference(x, w1_t, b1, g1, be1, w2_t, b2, g2, be2):
    """PyTorch-module semantics (train-mode BN, Linear biases applied),
    mirroring the kernel's bf16-matmul / f32-accumulate numerics."""
    def bn(h, g, be):
        m = jnp.mean(h, axis=0, keepdims=True)
        v = jnp.mean((h - m) ** 2, axis=0, keepdims=True)
        return (h - m) * lax.rsqrt(v + EPS) * g + be

    h = jnp.dot(x.astype(jnp.bfloat16), w1_t.astype(jnp.bfloat16),
                preferred_element_type=jnp.float32) + b1
    h = jnp.maximum(bn(h, g1, be1), 0.0)
    y = jnp.dot(h.astype(jnp.bfloat16), w2_t.astype(jnp.bfloat16),
                preferred_element_type=jnp.float32) + b2
    y = jnp.maximum(bn(y, g2, be2), 0.0)
    return y


if __name__ == "__main__":
    # Module defaults (input_dim=128, hidden_dim=512, output_dim=128); B=128
    # so BN batch stats are meaningful and the MXU M dimension is utilized.
    B, D_IN, D_HID, D_OUT = 128, 128, 512, 128

    key = jax.random.PRNGKey(0)
    k_x, k_w1, k_b1, k_g1, k_be1, k_w2, k_b2, k_g2, k_be2 = jax.random.split(key, 9)

    x = jax.random.normal(k_x, (B, D_IN), dtype=jnp.float32)

    # Deterministic synthetic parameters (PyTorch-like init scale).
    w1_t = jax.random.uniform(k_w1, (D_IN, D_HID), jnp.float32,
                              -1.0 / np.sqrt(D_IN), 1.0 / np.sqrt(D_IN))
    b1 = jax.random.uniform(k_b1, (1, D_HID), jnp.float32,
                            -1.0 / np.sqrt(D_IN), 1.0 / np.sqrt(D_IN))
    g1 = 1.0 + 0.1 * jax.random.normal(k_g1, (1, D_HID), jnp.float32)
    be1 = 0.1 * jax.random.normal(k_be1, (1, D_HID), jnp.float32)

    w2_t = jax.random.uniform(k_w2, (D_HID, D_OUT), jnp.float32,
                              -1.0 / np.sqrt(D_HID), 1.0 / np.sqrt(D_HID))
    b2 = jax.random.uniform(k_b2, (1, D_OUT), jnp.float32,
                            -1.0 / np.sqrt(D_HID), 1.0 / np.sqrt(D_HID))
    g2 = 1.0 + 0.1 * jax.random.normal(k_g2, (1, D_OUT), jnp.float32)
    be2 = 0.1 * jax.random.normal(k_be2, (1, D_OUT), jnp.float32)

    # Weights are cast to bf16 exactly once, outside the hot path.
    w1_bf = w1_t.astype(jnp.bfloat16)
    w2_bf = w2_t.astype(jnp.bfloat16)

    # Kernel omits the fc biases (they cancel under training-mode BN); the
    # reference applies them, proving the outputs still match.
    out = expander_forward(x, w1_bf, g1, be1, w2_bf, g2, be2)
    out = jax.block_until_ready(out)

    ref = jax.block_until_ready(
        _reference(x, w1_t, b1, g1, be1, w2_t, b2, g2, be2))

    # 2e-3 tolerance: the kernel re-quantizes hidden activations to bf16 before
    # fc2 along a mathematically identical but differently-rounded BN path.
    np.testing.assert_allclose(np.asarray(out), np.asarray(ref),
                               rtol=2e-3, atol=2e-3)

    print("KERNEL_OK")
</pallas_src>

<mosaic_0001>
module attributes {stable_mosaic.version = 11 : i64} {
  func.func @_expander_kernel(%arg0: i32, %arg1: memref<128x128xf32, #tpu.memory_space<vmem>>, %arg2: memref<128x512xbf16, #tpu.memory_space<vmem>>, %arg3: memref<1x512xf32, #tpu.memory_space<vmem>>, %arg4: memref<1x512xf32, #tpu.memory_space<vmem>>, %arg5: memref<512x128xbf16, #tpu.memory_space<vmem>>, %arg6: memref<1x128xf32, #tpu.memory_space<vmem>>, %arg7: memref<1x128xf32, #tpu.memory_space<vmem>>, %arg8: memref<128x128xf32, #tpu.memory_space<vmem>>, %arg9: memref<128x512xbf16, #tpu.memory_space<vmem>>) attributes {dimension_semantics = [#tpu.dimension_semantics<arbitrary>], iteration_bounds = array<i64: 1>, scalar_prefetch = 0 : i64, scratch_operands = 1 : i64, tpu.core_type = #tpu.core_type<tc>, window_params = [{pipeline_mode = #tpu.pipeline_mode<synchronous>, transform_indices = @transform_0, window_bounds = array<i64: 128, 128>}, {pipeline_mode = #tpu.pipeline_mode<synchronous>, transform_indices = @transform_1, window_bounds = array<i64: 128, 512>}, {pipeline_mode = #tpu.pipeline_mode<synchronous>, transform_indices = @transform_2, window_bounds = array<i64: 1, 512>}, {pipeline_mode = #tpu.pipeline_mode<synchronous>, transform_indices = @transform_3, window_bounds = array<i64: 1, 512>}, {transform_indices = @transform_4, window_bounds = array<i64: 512, 128>}, {transform_indices = @transform_5, window_bounds = array<i64: 1, 128>}, {transform_indices = @transform_6, window_bounds = array<i64: 1, 128>}, {transform_indices = @transform_7, window_bounds = array<i64: 128, 128>}]} {
    %c0_i32 = arith.constant 0 : i32
    %0 = arith.cmpi eq, %arg0, %c0_i32 : i32
    %1 = arith.extui %0 : i1 to i32
    %c0_i32_0 = arith.constant 0 : i32
    %2 = arith.cmpi ne, %1, %c0_i32_0 : i32
    scf.if %2 {
      %c0_16 = arith.constant 0 : index
      %c0_17 = arith.constant 0 : index
      %30 = vector.load %arg1[%c0_16, %c0_17] : memref<128x128xf32, #tpu.memory_space<vmem>>, vector<128x128xf32>
      %31 = arith.truncf %30 : vector<128x128xf32> to vector<128x128xbf16>
      %c0_18 = arith.constant 0 : index
      %c0_19 = arith.constant 0 : index
      %32 = vector.load %arg2[%c0_18, %c0_19] : memref<128x512xbf16, #tpu.memory_space<vmem>>, vector<128x512xbf16>
      %cst_20 = arith.constant dense<0.000000e+00> : vector<128x512xf32>
      %33 = tpu.matmul %31, %32, %cst_20 {dimension_numbers = #tpu.dot_dimension_numbers<[1], [0], [0], [1], [0, 0, 1, 1], [], []>} : vector<128x128xbf16>, vector<128x512xbf16>, vector<128x512xf32> -> vector<128x512xf32>
      %c0_21 = arith.constant 0 : index
      %c0_22 = arith.constant 0 : index
      %34 = vector.load %arg3[%c0_21, %c0_22] : memref<1x512xf32, #tpu.memory_space<vmem>>, vector<1x512xf32>
      %c0_23 = arith.constant 0 : index
      %c0_24 = arith.constant 0 : index
      %35 = vector.load %arg4[%c0_23, %c0_24] : memref<1x512xf32, #tpu.memory_space<vmem>>, vector<1x512xf32>
      %cst_25 = arith.constant dense<0.000000e+00> : vector<512xf32>
      %36 = vector.multi_reduction <add>, %33, %cst_25 [0] : vector<128x512xf32> to vector<512xf32>
      %37 = vector.shape_cast %36 : vector<512xf32> to vector<1x512xf32>
      %cst_26 = arith.constant 7.812500e-03 : f32
      %38 = vector.broadcast %cst_26 : f32 to vector<1x512xf32>
      %39 = arith.mulf %37, %38 : vector<1x512xf32>
      %40 = vector.broadcast %39 : vector<1x512xf32> to vector<128x512xf32>
      %41 = arith.subf %33, %40 : vector<128x512xf32>
      %42 = arith.mulf %41, %41 : vector<128x512xf32>
      %cst_27 = arith.constant dense<0.000000e+00> : vector<512xf32>
      %43 = vector.multi_reduction <add>, %42, %cst_27 [0] : vector<128x512xf32> to vector<512xf32>
      %44 = vector.shape_cast %43 : vector<512xf32> to vector<1x512xf32>
      %cst_28 = arith.constant 7.812500e-03 : f32
      %45 = vector.broadcast %cst_28 : f32 to vector<1x512xf32>
      %46 = arith.mulf %44, %45 : vector<1x512xf32>
      %cst_29 = arith.constant 9.99999974E-6 : f32
      %47 = vector.broadcast %cst_29 : f32 to vector<1x512xf32>
      %48 = arith.addf %46, %47 : vector<1x512xf32>
      %49 = math.rsqrt %48 : vector<1x512xf32>
      %50 = arith.mulf %34, %49 : vector<1x512xf32>
      %51 = vector.broadcast %50 : vector<1x512xf32> to vector<128x512xf32>
      %52 = arith.mulf %41, %51 : vector<128x512xf32>
      %53 = vector.broadcast %35 : vector<1x512xf32> to vector<128x512xf32>
      %54 = arith.addf %52, %53 : vector<128x512xf32>
      %cst_30 = arith.constant 0.000000e+00 : f32
      %55 = vector.broadcast %cst_30 : f32 to vector<128x512xf32>
      %56 = arith.maximumf %54, %55 : vector<128x512xf32>
      %57 = arith.truncf %56 : vector<128x512xf32> to vector<128x512xbf16>
      %c0_31 = arith.constant 0 : index
      %c0_32 = arith.constant 0 : index
      %58 = vector.load %arg9[%c0_31, %c0_32] : memref<128x512xbf16, #tpu.memory_space<vmem>>, vector<128x512xbf16>
      tpu.vector_store %arg9[%c0_31, %c0_32], %57 {strides = array<i32>} : memref<128x512xbf16, #tpu.memory_space<vmem>>, vector<128x512xbf16>,
    } else {
    }
    %c0 = arith.constant 0 : index
    %c0_1 = arith.constant 0 : index
    %3 = vector.load %arg9[%c0, %c0_1] : memref<128x512xbf16, #tpu.memory_space<vmem>>, vector<128x512xbf16>
    %c0_2 = arith.constant 0 : index
    %c0_3 = arith.constant 0 : index
    %4 = vector.load %arg5[%c0_2, %c0_3] : memref<512x128xbf16, #tpu.memory_space<vmem>>, vector<512x128xbf16>
    %cst = arith.constant dense<0.000000e+00> : vector<128x128xf32>
    %5 = tpu.matmul %3, %4, %cst {dimension_numbers = #tpu.dot_dimension_numbers<[1], [0], [0], [1], [0, 0, 1, 1], [], []>} : vector<128x512xbf16>, vector<512x128xbf16>, vector<128x128xf32> -> vector<128x128xf32>
    %c0_4 = arith.constant 0 : index
    %c0_5 = arith.constant 0 : index
    %6 = vector.load %arg6[%c0_4, %c0_5] : memref<1x128xf32, #tpu.memory_space<vmem>>, vector<1x128xf32>
    %c0_6 = arith.constant 0 : index
    %c0_7 = arith.constant 0 : index
    %7 = vector.load %arg7[%c0_6, %c0_7] : memref<1x128xf32, #tpu.memory_space<vmem>>, vector<1x128xf32>
    %cst_8 = arith.constant dense<0.000000e+00> : vector<128xf32>
    %8 = vector.multi_reduction <add>, %5, %cst_8 [0] : vector<128x128xf32> to vector<128xf32>
    %9 = vector.shape_cast %8 : vector<128xf32> to vector<1x128xf32>
    %cst_9 = arith.constant 7.812500e-03 : f32
    %10 = vector.broadcast %cst_9 : f32 to vector<1x128xf32>
    %11 = arith.mulf %9, %10 : vector<1x128xf32>
    %12 = vector.broadcast %11 : vector<1x128xf32> to vector<128x128xf32>
    %13 = arith.subf %5, %12 : vector<128x128xf32>
    %14 = arith.mulf %13, %13 : vector<128x128xf32>
    %cst_10 = arith.constant dense<0.000000e+00> : vector<128xf32>
    %15 = vector.multi_reduction <add>, %14, %cst_10 [0] : vector<128x128xf32> to vector<128xf32>
    %16 = vector.shape_cast %15 : vector<128xf32> to vector<1x128xf32>
    %cst_11 = arith.constant 7.812500e-03 : f32
    %17 = vector.broadcast %cst_11 : f32 to vector<1x128xf32>
    %18 = arith.mulf %16, %17 : vector<1x128xf32>
    %cst_12 = arith.constant 9.99999974E-6 : f32
    %19 = vector.broadcast %cst_12 : f32 to vector<1x128xf32>
    %20 = arith.addf %18, %19 : vector<1x128xf32>
    %21 = math.rsqrt %20 : vector<1x128xf32>
    %22 = arith.mulf %6, %21 : vector<1x128xf32>
    %23 = vector.broadcast %22 : vector<1x128xf32> to vector<128x128xf32>
    %24 = arith.mulf %13, %23 : vector<128x128xf32>
    %25 = vector.broadcast %7 : vector<1x128xf32> to vector<128x128xf32>
    %26 = arith.addf %24, %25 : vector<128x128xf32>
    %cst_13 = arith.constant 0.000000e+00 : f32
    %27 = vector.broadcast %cst_13 : f32 to vector<128x128xf32>
    %28 = arith.maximumf %26, %27 : vector<128x128xf32>
    %c0_14 = arith.constant 0 : index
    %c0_15 = arith.constant 0 : index
    %29 = vector.load %arg8[%c0_14, %c0_15] : memref<128x128xf32, #tpu.memory_space<vmem>>, vector<128x128xf32>
    tpu.vector_store %arg8[%c0_14, %c0_15], %28 {strides = array<i32>} : memref<128x128xf32, #tpu.memory_space<vmem>>, vector<128x128xf32>,
    return
  }
  func.func @transform_0(%arg0: i32) -> (i32, i32) {
    %c0_i32 = arith.constant 0 : i32
    %c0_i32_0 = arith.constant 0 : i32
    %c0_i32_1 = arith.constant 0 : i32
    return %c0_i32, %c0_i32_0 : i32, i32
  }
  func.func @transform_1(%arg0: i32) -> (i32, i32) {
    %c0_i32 = arith.constant 0 : i32
    %c0_i32_0 = arith.constant 0 : i32
    %c0_i32_1 = arith.constant 0 : i32
    return %c0_i32, %c0_i32_0 : i32, i32
  }
  func.func @transform_2(%arg0: i32) -> (i32, i32) {
    %c0_i32 = arith.constant 0 : i32
    %c0_i32_0 = arith.constant 0 : i32
    %c0_i32_1 = arith.constant 0 : i32
    return %c0_i32, %c0_i32_0 : i32, i32
  }
  func.func @transform_3(%arg0: i32) -> (i32, i32) {
    %c0_i32 = arith.constant 0 : i32
    %c0_i32_0 = arith.constant 0 : i32
    %c0_i32_1 = arith.constant 0 : i32
    return %c0_i32, %c0_i32_0 : i32, i32
  }
  func.func @transform_4(%arg0: i32) -> (i32, i32) {
    %c0_i32 = arith.constant 0 : i32
    %c0_i32_0 = arith.constant 0 : i32
    return %c0_i32, %arg0 : i32, i32
  }
  func.func @transform_5(%arg0: i32) -> (i32, i32) {
    %c0_i32 = arith.constant 0 : i32
    %c0_i32_0 = arith.constant 0 : i32
    return %c0_i32, %arg0 : i32, i32
  }
  func.func @transform_6(%arg0: i32) -> (i32, i32) {
    %c0_i32 = arith.constant 0 : i32
    %c0_i32_0 = arith.constant 0 : i32
    return %c0_i32, %arg0 : i32, i32
  }
  func.func @transform_7(%arg0: i32) -> (i32, i32) {
    %c0_i32 = arith.constant 0 : i32
    %c0_i32_0 = arith.constant 0 : i32
    return %c0_i32, %arg0 : i32, i32
  }
}

</mosaic_0001>

<llo_original>
// kernel: expander_forward.1
$region0: #{expander_forward.1}
  #allocation0 [shape = 'u32[]', space=smem, size = 0x4, offset = 0x4, fixed_abs, tag = 'smem constant byte address 0x4 - core index']
  #allocation1 [shape = 'u32[144,128]{1,0:T(1,128)}', space=vmem, size = 0x12000, scoped, tag = 'internal scratch']
  #allocation2 [shape = 'bf16[128,512]{1,0:T(16,128)(2,1)}', space=vmem, size = 0x20000, scoped, tag = 'scratch operand']
  %s0 = inlined_call_operand.hbm [shape: f32[128,128], index: 0, kind: input, shape index: {}]
  %s1 = inlined_call_operand.hbm [shape: bf16[128,512], index: 1, kind: input, shape index: {}]
  %s2 = inlined_call_operand.vmem [shape: f32[1,512], index: 2, kind: input, shape index: {}]
  %s3 = inlined_call_operand.vmem [shape: f32[1,512], index: 3, kind: input, shape index: {}]
  %s4 = inlined_call_operand.hbm [shape: bf16[512,128], index: 4, kind: input, shape index: {}]
  %s5 = inlined_call_operand.vmem [shape: f32[1,128], index: 5, kind: input, shape index: {}]
  %s6 = inlined_call_operand.vmem [shape: f32[1,128], index: 6, kind: input, shape index: {}]
  %s7 = inlined_call_operand.hbm [shape: f32[128,128], index: 7, kind: output, shape index: {}]
  %s8 = sld [smem:[#allocation0]]
  $region54: #{expander_forward.1} parent=0
    _
  %s10 = ssub.s32 1, %s8
  %s11 = scalar_select 0, %s10, %s8
  $region1: #{expander_forward.1} parent=0
    #allocation3 [shape = 'u8[65536]{0}', space=vmem, size = 0x10000, scoped, tag = 'input window, operand 0, single buffered']
    #allocation4 [shape = 's32[1]{0}', space=sflag, size = 0x4, scoped, tag = 'scoped memory for expander_forward.1']
    #allocation5 [shape = 's32[1]{0}', space=sflag, size = 0x4, scoped, tag = 'scoped memory for expander_forward.1']
    #allocation6 [shape = 'u8[131072]{0}', space=vmem, size = 0x20000, scoped, tag = 'input window, operand 1, single buffered']
    #allocation7 [shape = 's32[1]{0}', space=sflag, size = 0x4, scoped, tag = 'scoped memory for expander_forward.1']
    #allocation8 [shape = 'u8[131072]{0}', space=vmem, size = 0x20000, scoped, tag = 'input window, operand 4, single buffered']
    #allocation9 [shape = 'u8[65536]{0}', space=vmem, size = 0x10000, scoped, tag = 'output window, operand 0, single buffered']
    %12 = vsyncpa [#allocation4], 0
    %13 = vsyncpa [#allocation7], 0
    %14 = vsyncpa [#allocation5], 0
    // Predicated region
    $region2: #{expander_forward.1} parent=1 // pred_check
      _
    $region3: #{expander_forward.1} parent=1 // pred_check_branch
      %16 = sbr.rel (0) target = $region5
    $region4: #{expander_forward.1} parent=1 // pred_region
      %s18 = ssub.s32 2048, 2048
      %19 = vsyncadd [#allocation4], %s18
      %s20 = sshll.u32 [#allocation3], 4
      %s21 = int_to_ptr.vmem [resolvable:$true] %s20
      %26 = dma.hbm_to_vmem [thread:$0]  %s0, 2048, %s21, [#allocation4], 128, 128, 8
    $region5: #{expander_forward.1} parent=1 // pred_fallthru
      _
    // Predicated region
    $region6: #{expander_forward.1} parent=1 // pred_check
      _
    $region7: #{expander_forward.1} parent=1 // pred_check_branch
      %28 = sbr.rel (0) target = $region9
    $region8: #{expander_forward.1} parent=1 // pred_region
      %s30 = ssub.s32 4096, 4096
      %31 = vsyncadd [#allocation7], %s30
      %s32 = sshll.u32 [#allocation6], 4
      %s33 = int_to_ptr.vmem [resolvable:$true] %s32
      %38 = dma.hbm_to_vmem [thread:$0]  %s1, 4096, %s33, [#allocation7], 256, 256, 16
    $region9: #{expander_forward.1} parent=1 // pred_fallthru
      _
    // Predicated region
    $region10: #{expander_forward.1} parent=1 // pred_check
      _
    $region11: #{expander_forward.1} parent=1 // pred_check_branch
      %40 = sbr.rel (0) target = $region13
    $region12: #{expander_forward.1} parent=1 // pred_region
      _
    $region13: #{expander_forward.1} parent=1 // pred_fallthru
      _
    // Predicated region
    $region14: #{expander_forward.1} parent=1 // pred_check
      _
    $region15: #{expander_forward.1} parent=1 // pred_check_branch
      %42 = sbr.rel (0) target = $region17
    $region16: #{expander_forward.1} parent=1 // pred_region
      _
    $region17: #{expander_forward.1} parent=1 // pred_fallthru
      _
    // Predicated region
    $region18: #{expander_forward.1} parent=1 // pred_check
      _
    $region19: #{expander_forward.1} parent=1 // pred_check_branch
      %44 = sbr.rel (0) target = $region21
    $region20: #{expander_forward.1} parent=1 // pred_region
      %s46 = ssub.s32 4096, 4096
      %47 = vsyncadd [#allocation7], %s46
      %s48 = sshll.u32 [#allocation8], 4
      %s49 = int_to_ptr.vmem [resolvable:$true] %s48
      %54 = dma.hbm_to_vmem [thread:$0]  %s4, 4096, %s49, [#allocation7], 64, 64, 4
    $region21: #{expander_forward.1} parent=1 // pred_fallthru
      _
    // Predicated region
    $region22: #{expander_forward.1} parent=1 // pred_check
      _
    $region23: #{expander_forward.1} parent=1 // pred_check_branch
      %56 = sbr.rel (0) target = $region25
    $region24: #{expander_forward.1} parent=1 // pred_region
      _
    $region25: #{expander_forward.1} parent=1 // pred_fallthru
      _
    // Predicated region
    $region26: #{expander_forward.1} parent=1 // pred_check
      _
    $region27: #{expander_forward.1} parent=1 // pred_check_branch
      %58 = sbr.rel (0) target = $region29
    $region28: #{expander_forward.1} parent=1 // pred_region
      _
    $region29: #{expander_forward.1} parent=1 // pred_fallthru
      _
    // Predicated region
    $region30: #{expander_forward.1} parent=1 // pred_check
      _
    $region31: #{expander_forward.1} parent=1 // pred_check_branch
      %60 = sbr.rel (0) target = $region33
    $region32: #{expander_forward.1} parent=1 // pred_region
      %61 = dma.done [#allocation4], 2048
    $region33: #{expander_forward.1} parent=1 // pred_fallthru
      _
    // Predicated region
    $region34: #{expander_forward.1} parent=1 // pred_check
      _
    $region35: #{expander_forward.1} parent=1 // pred_check_branch
      %63 = sbr.rel (0) target = $region37
    $region36: #{expander_forward.1} parent=1 // pred_region
      %64 = dma.done [#allocation7], 4096
    $region37: #{expander_forward.1} parent=1 // pred_fallthru
      _
    // Predicated region
    $region38: #{expander_forward.1} parent=1 // pred_check
      _
    $region39: #{expander_forward.1} parent=1 // pred_check_branch
      %66 = sbr.rel (0) target = $region41
    $region40: #{expander_forward.1} parent=1 // pred_region
      %67 = dma.done [#allocation7], 4096
    $region41: #{expander_forward.1} parent=1 // pred_fallthru
      _
    %p69 = scmp.eq.s32.totalorder 0, 0
    // Predicated region
    $region42: #{expander_forward.1} parent=1 // pred_check
      %p70 = pneg %p69
    $region43: #{expander_forward.1} parent=1 // pred_check_branch
      %72 = sbr.rel (%p70) target = $region45
    $region44: #{expander_forward.1} parent=1 // pred_region
      %v73 = vld [vmem:[#allocation3] sm:$0xff]
      %v74 = vld [vmem:[#allocation3 + $0x8] sm:$0xff]
      %v75 = vld [vmem:[#allocation3 + $0x10] sm:$0xff]
      %v76 = vld [vmem:[#allocation3 + $0x18] sm:$0xff]
      %v77 = vld [vmem:[#allocation3 + $0x20] sm:$0xff]
      %v78 = vld [vmem:[#allocation3 + $0x28] sm:$0xff]
      %v79 = vld [vmem:[#allocation3 + $0x30] sm:$0xff]
      %v80 = vld [vmem:[#allocation3 + $0x38] sm:$0xff]
      %v81 = vld [vmem:[#allocation3 + $0x40] sm:$0xff]
      %v82 = vld [vmem:[#allocation3 + $0x48] sm:$0xff]
      %v83 = vld [vmem:[#allocation3 + $0x50] sm:$0xff]
      %v84 = vld [vmem:[#allocation3 + $0x58] sm:$0xff]
      %v85 = vld [vmem:[#allocation3 + $0x60] sm:$0xff]
      %v86 = vld [vmem:[#allocation3 + $0x68] sm:$0xff]
      %v87 = vld [vmem:[#allocation3 + $0x70] sm:$0xff]
      %v88 = vld [vmem:[#allocation3 + $0x78] sm:$0xff]
      %v89 = vpack.c.bf16 %v74, %v73
      %v90 = vpack.c.bf16 %v76, %v75
      %v91 = vpack.c.bf16 %v78, %v77
      %v92 = vpack.c.bf16 %v80, %v79
      %v93 = vpack.c.bf16 %v82, %v81
      %v94 = vpack.c.bf16 %v84, %v83
      %v95 = vpack.c.bf16 %v86, %v85
      %v96 = vpack.c.bf16 %v88, %v87
      %v97 = vld [vmem:[#allocation6] sm:$0xff]
      %v98 = vld [vmem:[#allocation6 + $0x8] sm:$0xff]
      %v99 = vld [vmem:[#allocation6 + $0x10] sm:$0xff]
      %v100 = vld [vmem:[#allocation6 + $0x18] sm:$0xff]
      %v101 = vld [vmem:[#allocation6 + $0x20] sm:$0xff]
      %v102 = vld [vmem:[#allocation6 + $0x28] sm:$0xff]
      %v103 = vld [vmem:[#allocation6 + $0x30] sm:$0xff]
      %v104 = vld [vmem:[#allocation6 + $0x38] sm:$0xff]
      %v105 = vld [vmem:[#allocation6 + $0x40] sm:$0xff]
      %v106 = vld [vmem:[#allocation6 + $0x48] sm:$0xff]
      %v107 = vld [vmem:[#allocation6 + $0x50] sm:$0xff]
      %v108 = vld [vmem:[#allocation6 + $0x58] sm:$0xff]
      %v109 = vld [vmem:[#allocation6 + $0x60] sm:$0xff]
      %v110 = vld [vmem:[#allocation6 + $0x68] sm:$0xff]
      %v111 = vld [vmem:[#allocation6 + $0x70] sm:$0xff]
      %v112 = vld [vmem:[#allocation6 + $0x78] sm:$0xff]
      %v113 = vld [vmem:[#allocation6 + $0x80] sm:$0xff]
      %v114 = vld [vmem:[#allocation6 + $0x88] sm:$0xff]
      %v115 = vld [vmem:[#allocation6 + $0x90] sm:$0xff]
      %v116 = vld [vmem:[#allocation6 + $0x98] sm:$0xff]
      %v117 = vld [vmem:[#allocation6 + $0xa0] sm:$0xff]
      %v118 = vld [vmem:[#allocation6 + $0xa8] sm:$0xff]
      %v119 = vld [vmem:[#allocation6 + $0xb0] sm:$0xff]
      %v120 = vld [vmem:[#allocation6 + $0xb8] sm:$0xff]
      %v121 = vld [vmem:[#allocation6 + $0xc0] sm:$0xff]
      %v122 = vld [vmem:[#allocation6 + $0xc8] sm:$0xff]
      %v123 = vld [vmem:[#allocation6 + $0xd0] sm:$0xff]
      %v124 = vld [vmem:[#allocation6 + $0xd8] sm:$0xff]
      %v125 = vld [vmem:[#allocation6 + $0xe0] sm:$0xff]
      %v126 = vld [vmem:[#allocation6 + $0xe8] sm:$0xff]
      %v127 = vld [vmem:[#allocation6 + $0xf0] sm:$0xff]
      %v128 = vld [vmem:[#allocation6 + $0xf8] sm:$0xff]
      %v161 = vunpack.c.l.b16 %v97
      %v162 = vunpack.c.h.b16 %v97
      %v163 = vunpack.c.l.b16 %v98
      %v164 = vunpack.c.h.b16 %v98
      %v165 = vunpack.c.l.b16 %v99
      %v166 = vunpack.c.h.b16 %v99
      %v167 = vunpack.c.l.b16 %v100
      %v168 = vunpack.c.h.b16 %v100
      %v169 = vunpack.c.l.b16 %v101
      %v170 = vunpack.c.h.b16 %v101
      %v171 = vunpack.c.l.b16 %v102
      %v172 = vunpack.c.h.b16 %v102
      %v173 = vunpack.c.l.b16 %v103
      %v174 = vunpack.c.h.b16 %v103
      %v175 = vunpack.c.l.b16 %v104
      %v176 = vunpack.c.h.b16 %v104
      %v177 = vunpack.c.l.b16 %v105
      %v178 = vunpack.c.h.b16 %v105
      %v179 = vunpack.c.l.b16 %v106
      %v180 = vunpack.c.h.b16 %v106
      %v181 = vunpack.c.l.b16 %v107
      %v182 = vunpack.c.h.b16 %v107
      %v183 = vunpack.c.l.b16 %v108
      %v184 = vunpack.c.h.b16 %v108
      %v185 = vunpack.c.l.b16 %v109
      %v186 = vunpack.c.h.b16 %v109
      %v187 = vunpack.c.l.b16 %v110
      %v188 = vunpack.c.h.b16 %v110
      %v189 = vunpack.c.l.b16 %v111
      %v190 = vunpack.c.h.b16 %v111
      %v191 = vunpack.c.l.b16 %v112
      %v192 = vunpack.c.h.b16 %v112
      %v193 = vunpack.c.l.b16 %v113
      %v194 = vunpack.c.h.b16 %v113
      %v195 = vunpack.c.l.b16 %v114
      %v196 = vunpack.c.h.b16 %v114
      %v197 = vunpack.c.l.b16 %v115
      %v198 = vunpack.c.h.b16 %v115
      %v199 = vunpack.c.l.b16 %v116
      %v200 = vunpack.c.h.b16 %v116
      %v201 = vunpack.c.l.b16 %v117
      %v202 = vunpack.c.h.b16 %v117
      %v203 = vunpack.c.l.b16 %v118
      %v204 = vunpack.c.h.b16 %v118
      %v205 = vunpack.c.l.b16 %v119
      %v206 = vunpack.c.h.b16 %v119
      %v207 = vunpack.c.l.b16 %v120
      %v208 = vunpack.c.h.b16 %v120
      %v209 = vunpack.c.l.b16 %v121
      %v210 = vunpack.c.h.b16 %v121
      %v211 = vunpack.c.l.b16 %v122
      %v212 = vunpack.c.h.b16 %v122
      %v213 = vunpack.c.l.b16 %v123
      %v214 = vunpack.c.h.b16 %v123
      %v215 = vunpack.c.l.b16 %v124
      %v216 = vunpack.c.h.b16 %v124
      %v217 = vunpack.c.l.b16 %v125
      %v218 = vunpack.c.h.b16 %v125
      %v219 = vunpack.c.l.b16 %v126
      %v220 = vunpack.c.h.b16 %v126
      %v221 = vunpack.c.l.b16 %v127
      %v222 = vunpack.c.h.b16 %v127
      %v223 = vunpack.c.l.b16 %v128
      %v224 = vunpack.c.h.b16 %v128
      %v225 = vpack.c.b16 %v165, %v161
      %v226 = vpack.c.b16 %v166, %v162
      %v227 = vpack.c.b16 %v167, %v163
      %v228 = vpack.c.b16 %v168, %v164
      %v229 = vpack.c.b16 %v173, %v169
      %v230 = vpack.c.b16 %v174, %v170
      %v231 = vpack.c.b16 %v175, %v171
      %v232 = vpack.c.b16 %v176, %v172
      %v233 = vpack.c.b16 %v181, %v177
      %v234 = vpack.c.b16 %v182, %v178
      %v235 = vpack.c.b16 %v183, %v179
      %v236 = vpack.c.b16 %v184, %v180
      %v237 = vpack.c.b16 %v189, %v185
      %v238 = vpack.c.b16 %v190, %v186
      %v239 = vpack.c.b16 %v191, %v187
      %v240 = vpack.c.b16 %v192, %v188
      %v241 = vpack.c.b16 %v197, %v193
      %v242 = vpack.c.b16 %v198, %v194
      %v243 = vpack.c.b16 %v199, %v195
      %v244 = vpack.c.b16 %v200, %v196
      %v245 = vpack.c.b16 %v205, %v201
      %v246 = vpack.c.b16 %v206, %v202
      %v247 = vpack.c.b16 %v207, %v203
      %v248 = vpack.c.b16 %v208, %v204
      %v249 = vpack.c.b16 %v213, %v209
      %v250 = vpack.c.b16 %v214, %v210
      %v251 = vpack.c.b16 %v215, %v211
      %v252 = vpack.c.b16 %v216, %v212
      %v253 = vpack.c.b16 %v221, %v217
      %v254 = vpack.c.b16 %v222, %v218
      %v255 = vpack.c.b16 %v223, %v219
      %v256 = vpack.c.b16 %v224, %v220
      %289 = vmatprep.subr.bf16.mxu0 %v226
      %290 = vmatpush1.bf16.msra.mxu0 %v225
      %291 = vmatprep.subr.bf16.mxu0 %v230
      %292 = vmatpush1.bf16.msra.mxu0 %v229
      %293 = vmatprep.subr.bf16.mxu0 %v234
      %294 = vmatpush1.bf16.msra.mxu0 %v233
      %295 = vmatprep.subr.bf16.mxu0 %v238
      %296 = vmatpush1.bf16.msra.mxu0 %v237
      %297 = vmatprep.subr.bf16.mxu0 %v242
      %298 = vmatpush1.bf16.msra.mxu0 %v241
      %299 = vmatprep.subr.bf16.mxu0 %v246
      %300 = vmatpush1.bf16.msra.mxu0 %v245
      %301 = vmatprep.subr.bf16.mxu0 %v250
      %302 = vmatpush1.bf16.msra.mxu0 %v249
      %303 = vmatprep.subr.bf16.mxu0 %v254
      %304 = vmatpush1.bf16.msra.mxu0 %v253
      %305 = vmatprep.subr.bf16.mxu0 0
      %306 = vmatpush1.bf16.msra.mxu0 0
      %307 = vmatprep.subr.bf16.mxu0 0
      %308 = vmatpush1.bf16.msra.mxu0 0
      %309 = vmatprep.subr.bf16.mxu0 0
      %310 = vmatpush1.bf16.msra.mxu0 0
      %311 = vmatprep.subr.bf16.mxu0 0
      %312 = vmatpush1.bf16.msra.mxu0 0
      %313 = vmatprep.subr.bf16.mxu0 0
      %314 = vmatpush1.bf16.msra.mxu0 0
      %315 = vmatprep.subr.bf16.mxu0 0
      %316 = vmatpush1.bf16.msra.mxu0 0
      %317 = vmatprep.subr.bf16.mxu0 0
      %318 = vmatpush1.bf16.msra.mxu0 0
      %319 = vmatprep.subr.bf16.mxu0 0
      %320 = vmatpush1.bf16.msra.mxu0 0
      %321 = vmatprep.mubr.bf16.mxu0 0
      %322 = vmatmul.mubr.bf16.gmra.mrb[0].mxu0 %v89
      %v323 = vpop.f32.mrb[0].mxu0
      %v324 = vadd.f32 0.0, %v323
      %v325 = vpop.f32.mrb[0].mxu0
      %v326 = vadd.f32 0.0, %v325
      %v327 = vpop.f32.mrb[0].mxu0
      %v328 = vadd.f32 0.0, %v327
      %v329 = vpop.f32.mrb[0].mxu0
      %v330 = vadd.f32 0.0, %v329
      %331 = vmatprep.mubr.bf16.mxu0 0
      %332 = vmatmul.mubr.bf16.gmra.mrb[0].mxu0 %v90
      %v333 = vpop.f32.mrb[0].mxu0
      %v334 = vadd.f32 0.0, %v333
      %v335 = vpop.f32.mrb[0].mxu0
      %v336 = vadd.f32 0.0, %v335
      %v337 = vpop.f32.mrb[0].mxu0
      %v338 = vadd.f32 0.0, %v337
      %v339 = vpop.f32.mrb[0].mxu0
      %v340 = vadd.f32 0.0, %v339
      %341 = vmatprep.mubr.bf16.mxu0 0
      %342 = vmatmul.mubr.bf16.gmra.mrb[0].mxu0 %v91
      %v343 = vpop.f32.mrb[0].mxu0
      %v344 = vadd.f32 0.0, %v343
      %v345 = vpop.f32.mrb[0].mxu0
      %v346 = vadd.f32 0.0, %v345
      %v347 = vpop.f32.mrb[0].mxu0
      %v348 = vadd.f32 0.0, %v347
      %v349 = vpop.f32.mrb[0].mxu0
      %v350 = vadd.f32 0.0, %v349
      %351 = vmatprep.mubr.bf16.mxu0 0
      %352 = vmatmul.mubr.bf16.gmra.mrb[0].mxu0 %v92
      %v353 = vpop.f32.mrb[0].mxu0
      %v354 = vadd.f32 0.0, %v353
      %v355 = vpop.f32.mrb[0].mxu0
      %v356 = vadd.f32 0.0, %v355
      %v357 = vpop.f32.mrb[0].mxu0
      %v358 = vadd.f32 0.0, %v357
      %v359 = vpop.f32.mrb[0].mxu0
      %v360 = vadd.f32 0.0, %v359
      %361 = vmatprep.mubr.bf16.mxu0 0
      %362 = vmatmul.mubr.bf16.gmra.mrb[0].mxu0 %v93
      %v363 = vpop.f32.mrb[0].mxu0
      %v364 = vadd.f32 0.0, %v363
      %v365 = vpop.f32.mrb[0].mxu0
      %v366 = vadd.f32 0.0, %v365
      %v367 = vpop.f32.mrb[0].mxu0
      %v368 = vadd.f32 0.0, %v367
      %v369 = vpop.f32.mrb[0].mxu0
      %v370 = vadd.f32 0.0, %v369
      %371 = vmatprep.mubr.bf16.mxu0 0
      %372 = vmatmul.mubr.bf16.gmra.mrb[0].mxu0 %v94
      %v373 = vpop.f32.mrb[0].mxu0
      %v374 = vadd.f32 0.0, %v373
      %v375 = vpop.f32.mrb[0].mxu0
      %v376 = vadd.f32 0.0, %v375
      %v377 = vpop.f32.mrb[0].mxu0
      %v378 = vadd.f32 0.0, %v377
      %v379 = vpop.f32.mrb[0].mxu0
      %v380 = vadd.f32 0.0, %v379
      %381 = vmatprep.mubr.bf16.mxu0 0
      %382 = vmatmul.mubr.bf16.gmra.mrb[0].mxu0 %v95
      %v383 = vpop.f32.mrb[0].mxu0
      %v384 = vadd.f32 0.0, %v383
      %v385 = vpop.f32.mrb[0].mxu0
      %v386 = vadd.f32 0.0, %v385
      %v387 = vpop.f32.mrb[0].mxu0
      %v388 = vadd.f32 0.0, %v387
      %v389 = vpop.f32.mrb[0].mxu0
      %v390 = vadd.f32 0.0, %v389
      %391 = vmatprep.mubr.bf16.mxu0 0
      %392 = vmatmul.mubr.bf16.gmra.mrb[0].mxu0 %v96
      %v393 = vpop.f32.mrb[0].mxu0
      %v394 = vadd.f32 0.0, %v393
      %v395 = vpop.f32.mrb[0].mxu0
      %v396 = vadd.f32 0.0, %v395
      %v397 = vpop.f32.mrb[0].mxu0
      %v398 = vadd.f32 0.0, %v397
      %v399 = vpop.f32.mrb[0].mxu0
      %v400 = vadd.f32 0.0, %v399
      %401 = vdwg.mxu0
      %402 = vmatprep.subr.bf16.mxu0 %v228
      %403 = vmatpush1.bf16.msra.mxu0 %v227
      %404 = vmatprep.subr.bf16.mxu0 %v232
      %405 = vmatpush1.bf16.msra.mxu0 %v231
      %406 = vmatprep.subr.bf16.mxu0 %v236
      %407 = vmatpush1.bf16.msra.mxu0 %v235
      %408 = vmatprep.subr.bf16.mxu0 %v240
      %409 = vmatpush1.bf16.msra.mxu0 %v239
      %410 = vmatprep.subr.bf16.mxu0 %v244
      %411 = vmatpush1.bf16.msra.mxu0 %v243
      %412 = vmatprep.subr.bf16.mxu0 %v248
      %413 = vmatpush1.bf16.msra.mxu0 %v247
      %414 = vmatprep.subr.bf16.mxu0 %v252
      %415 = vmatpush1.bf16.msra.mxu0 %v251
      %416 = vmatprep.subr.bf16.mxu0 %v256
      %417 = vmatpush1.bf16.msra.mxu0 %v255
      %418 = vmatprep.subr.bf16.mxu0 0
      %419 = vmatpush1.bf16.msra.mxu0 0
      %420 = vmatprep.subr.bf16.mxu0 0
      %421 = vmatpush1.bf16.msra.mxu0 0
      %422 = vmatprep.subr.bf16.mxu0 0
      %423 = vmatpush1.bf16.msra.mxu0 0
      %424 = vmatprep.subr.bf16.mxu0 0
      %425 = vmatpush1.bf16.msra.mxu0 0
      %426 = vmatprep.subr.bf16.mxu0 0
      %427 = vmatpush1.bf16.msra.mxu0 0
      %428 = vmatprep.subr.bf16.mxu0 0
      %429 = vmatpush1.bf16.msra.mxu0 0
      %430 = vmatprep.subr.bf16.mxu0 0
      %431 = vmatpush1.bf16.msra.mxu0 0
      %432 = vmatprep.subr.bf16.mxu0 0
      %433 = vmatpush1.bf16.msra.mxu0 0
      %434 = vmatprep.mubr.bf16.mxu0 0
      %435 = vmatmul.mubr.bf16.gmra.mrb[0].mxu0 %v89
      %v436 = vpop.f32.mrb[0].mxu0
      %v437 = vadd.f32 0.0, %v436
      %v438 = vpop.f32.mrb[0].mxu0
      %v439 = vadd.f32 0.0, %v438
      %v440 = vpop.f32.mrb[0].mxu0
      %v441 = vadd.f32 0.0, %v440
      %v442 = vpop.f32.mrb[0].mxu0
      %v443 = vadd.f32 0.0, %v442
      %444 = vmatprep.mubr.bf16.mxu0 0
      %445 = vmatmul.mubr.bf16.gmra.mrb[0].mxu0 %v90
      %v446 = vpop.f32.mrb[0].mxu0
      %v447 = vadd.f32 0.0, %v446
      %v448 = vpop.f32.mrb[0].mxu0
      %v449 = vadd.f32 0.0, %v448
      %v450 = vpop.f32.mrb[0].mxu0
      %v451 = vadd.f32 0.0, %v450
      %v452 = vpop.f32.mrb[0].mxu0
      %v453 = vadd.f32 0.0, %v452
      %454 = vmatprep.mubr.bf16.mxu0 0
      %455 = vmatmul.mubr.bf16.gmra.mrb[0].mxu0 %v91
      %v456 = vpop.f32.mrb[0].mxu0
      %v457 = vadd.f32 0.0, %v456
      %v458 = vpop.f32.mrb[0].mxu0
      %v459 = vadd.f32 0.0, %v458
      %v460 = vpop.f32.mrb[0].mxu0
      %v461 = vadd.f32 0.0, %v460
      %v462 = vpop.f32.mrb[0].mxu0
      %v463 = vadd.f32 0.0, %v462
      %464 = vmatprep.mubr.bf16.mxu0 0
      %465 = vmatmul.mubr.bf16.gmra.mrb[0].mxu0 %v92
      %v466 = vpop.f32.mrb[0].mxu0
      %v467 = vadd.f32 0.0, %v466
      %v468 = vpop.f32.mrb[0].mxu0
      %v469 = vadd.f32 0.0, %v468
      %v470 = vpop.f32.mrb[0].mxu0
      %v471 = vadd.f32 0.0, %v470
      %v472 = vpop.f32.mrb[0].mxu0
      %v473 = vadd.f32 0.0, %v472
      %474 = vmatprep.mubr.bf16.mxu0 0
      %475 = vmatmul.mubr.bf16.gmra.mrb[0].mxu0 %v93
      %v476 = vpop.f32.mrb[0].mxu0
      %v477 = vadd.f32 0.0, %v476
      %v478 = vpop.f32.mrb[0].mxu0
      %v479 = vadd.f32 0.0, %v478
      %v480 = vpop.f32.mrb[0].mxu0
      %v481 = vadd.f32 0.0, %v480
      %v482 = vpop.f32.mrb[0].mxu0
      %v483 = vadd.f32 0.0, %v482
      %484 = vmatprep.mubr.bf16.mxu0 0
      %485 = vmatmul.mubr.bf16.gmra.mrb[0].mxu0 %v94
      %v486 = vpop.f32.mrb[0].mxu0
      %v487 = vadd.f32 0.0, %v486
      %v488 = vpop.f32.mrb[0].mxu0
      %v489 = vadd.f32 0.0, %v488
      %v490 = vpop.f32.mrb[0].mxu0
      %v491 = vadd.f32 0.0, %v490
      %v492 = vpop.f32.mrb[0].mxu0
      %v493 = vadd.f32 0.0, %v492
      %494 = vmatprep.mubr.bf16.mxu0 0
      %495 = vmatmul.mubr.bf16.gmra.mrb[0].mxu0 %v95
      %v496 = vpop.f32.mrb[0].mxu0
      %v497 = vadd.f32 0.0, %v496
      %v498 = vpop.f32.mrb[0].mxu0
      %v499 = vadd.f32 0.0, %v498
      %v500 = vpop.f32.mrb[0].mxu0
      %v501 = vadd.f32 0.0, %v500
      %v502 = vpop.f32.mrb[0].mxu0
      %v503 = vadd.f32 0.0, %v502
      %504 = vmatprep.mubr.bf16.mxu0 0
      %505 = vmatmul.mubr.bf16.gmra.mrb[0].mxu0 %v96
      %v506 = vpop.f32.mrb[0].mxu0
      %v507 = vadd.f32 0.0, %v506
      %v508 = vpop.f32.mrb[0].mxu0
      %v509 = vadd.f32 0.0, %v508
      %v510 = vpop.f32.mrb[0].mxu0
      %v511 = vadd.f32 0.0, %v510
      %v512 = vpop.f32.mrb[0].mxu0
      %v513 = vadd.f32 0.0, %v512
      %514 = vdwg.mxu0
      %v515 = vld [vmem:[%s2] sm:$0xf]
      %v516 = vld [vmem:[%s3] sm:$0xf]
      %v517 = vadd.f32 %v324, %v328
      %v518 = vadd.f32 %v517, %v334
      %v519 = vadd.f32 %v518, %v338
      %v520 = vadd.f32 %v519, %v344
      %v521 = vadd.f32 %v520, %v348
      %v522 = vadd.f32 %v521, %v354
      %v523 = vadd.f32 %v522, %v358
      %v524 = vadd.f32 %v523, %v364
      %v525 = vadd.f32 %v524, %v368
      %v526 = vadd.f32 %v525, %v374
      %v527 = vadd.f32 %v526, %v378
      %v528 = vadd.f32 %v527, %v384
      %v529 = vadd.f32 %v528, %v388
      %v530 = vadd.f32 %v529, %v394
      %v531 = vadd.f32 %v530, %v398
      %v532 = vrot.slane %v531, 4
      %v533 = vadd.f32 %v531, %v532
      %v534 = vrot.slane %v533, 2
      %v535 = vadd.f32 %v533, %v534
      %v536 = vrot.slane %v535, 1
      %v537 = vadd.f32 %v535, %v536
      %v538 = vadd.f32 %v326, %v330
      %v539 = vadd.f32 %v538, %v336
      %v540 = vadd.f32 %v539, %v340
      %v541 = vadd.f32 %v540, %v346
      %v542 = vadd.f32 %v541, %v350
      %v543 = vadd.f32 %v542, %v356
      %v544 = vadd.f32 %v543, %v360
      %v545 = vadd.f32 %v544, %v366
      %v546 = vadd.f32 %v545, %v370
      %v547 = vadd.f32 %v546, %v376
      %v548 = vadd.f32 %v547, %v380
      %v549 = vadd.f32 %v548, %v386
      %v550 = vadd.f32 %v549, %v390
      %v551 = vadd.f32 %v550, %v396
      %v552 = vadd.f32 %v551, %v400
      %v553 = vrot.slane %v552, 4
      %v554 = vadd.f32 %v552, %v553
      %v555 = vrot.slane %v554, 2
      %v556 = vadd.f32 %v554, %v555
      %v557 = vrot.slane %v556, 1
      %v558 = vadd.f32 %v556, %v557
      %v559 = vadd.f32 %v437, %v441
      %v560 = vadd.f32 %v559, %v447
      %v561 = vadd.f32 %v560, %v451
      %v562 = vadd.f32 %v561, %v457
      %v563 = vadd.f32 %v562, %v461
      %v564 = vadd.f32 %v563, %v467
      %v565 = vadd.f32 %v564, %v471
      %v566 = vadd.f32 %v565, %v477
      %v567 = vadd.f32 %v566, %v481
      %v568 = vadd.f32 %v567, %v487
      %v569 = vadd.f32 %v568, %v491
      %v570 = vadd.f32 %v569, %v497
      %v571 = vadd.f32 %v570, %v501
      %v572 = vadd.f32 %v571, %v507
      %v573 = vadd.f32 %v572, %v511
      %v574 = vrot.slane %v573, 4
      %v575 = vadd.f32 %v573, %v574
      %v576 = vrot.slane %v575, 2
      %v577 = vadd.f32 %v575, %v576
      %v578 = vrot.slane %v577, 1
      %v579 = vadd.f32 %v577, %v578
      %v580 = vadd.f32 %v439, %v443
      %v581 = vadd.f32 %v580, %v449
      %v582 = vadd.f32 %v581, %v453
      %v583 = vadd.f32 %v582, %v459
      %v584 = vadd.f32 %v583, %v463
      %v585 = vadd.f32 %v584, %v469
      %v586 = vadd.f32 %v585, %v473
      %v587 = vadd.f32 %v586, %v479
      %v588 = vadd.f32 %v587, %v483
      %v589 = vadd.f32 %v588, %v489
      %v590 = vadd.f32 %v589, %v493
      %v591 = vadd.f32 %v590, %v499
      %v592 = vadd.f32 %v591, %v503
      %v593 = vadd.f32 %v592, %v509
      %v594 = vadd.f32 %v593, %v513
      %v595 = vrot.slane %v594, 4
      %v596 = vadd.f32 %v594, %v595
      %v597 = vrot.slane %v596, 2
      %v598 = vadd.f32 %v596, %v597
      %v599 = vrot.slane %v598, 1
      %v600 = vadd.f32 %v598, %v599
      %v601 = vmul.f32 %v537, 0.0078125
      %v602 = vmul.f32 %v558, 0.0078125
      %v603 = vmul.f32 %v579, 0.0078125
      %v604 = vmul.f32 %v600, 0.0078125
      %v605 = vsub.f32 %v324, %v601
      %v606 = vsub.f32 %v326, %v602
      %v607 = vsub.f32 %v437, %v603
      %v608 = vsub.f32 %v439, %v604
      %v609 = vsub.f32 %v328, %v601
      %v610 = vsub.f32 %v330, %v602
      %v611 = vsub.f32 %v441, %v603
      %v612 = vsub.f32 %v443, %v604
      %v613 = vsub.f32 %v334, %v601
      %v614 = vsub.f32 %v336, %v602
      %v615 = vsub.f32 %v447, %v603
      %v616 = vsub.f32 %v449, %v604
      %v617 = vsub.f32 %v338, %v601
      %v618 = vsub.f32 %v340, %v602
      %v619 = vsub.f32 %v451, %v603
      %v620 = vsub.f32 %v453, %v604
      %v621 = vsub.f32 %v344, %v601
      %v622 = vsub.f32 %v346, %v602
      %v623 = vsub.f32 %v457, %v603
      %v624 = vsub.f32 %v459, %v604
      %v625 = vsub.f32 %v348, %v601
      %v626 = vsub.f32 %v350, %v602
      %v627 = vsub.f32 %v461, %v603
      %v628 = vsub.f32 %v463, %v604
      %v629 = vsub.f32 %v354, %v601
      %v630 = vsub.f32 %v356, %v602
      %v631 = vsub.f32 %v467, %v603
      %v632 = vsub.f32 %v469, %v604
      %v633 = vsub.f32 %v358, %v601
      %v634 = vsub.f32 %v360, %v602
      %v635 = vsub.f32 %v471, %v603
      %v636 = vsub.f32 %v473, %v604
      %v637 = vsub.f32 %v364, %v601
      %v638 = vsub.f32 %v366, %v602
      %v639 = vsub.f32 %v477, %v603
      %v640 = vsub.f32 %v479, %v604
      %v641 = vsub.f32 %v368, %v601
      %v642 = vsub.f32 %v370, %v602
      %v643 = vsub.f32 %v481, %v603
      %v644 = vsub.f32 %v483, %v604
      %v645 = vsub.f32 %v374, %v601
      %v646 = vsub.f32 %v376, %v602
      %v647 = vsub.f32 %v487, %v603
      %v648 = vsub.f32 %v489, %v604
      %v649 = vsub.f32 %v378, %v601
      %v650 = vsub.f32 %v380, %v602
      %v651 = vsub.f32 %v491, %v603
      %v652 = vsub.f32 %v493, %v604
      %v653 = vsub.f32 %v384, %v601
      %v654 = vsub.f32 %v386, %v602
      %v655 = vsub.f32 %v497, %v603
      %v656 = vsub.f32 %v499, %v604
      %v657 = vsub.f32 %v388, %v601
      %v658 = vsub.f32 %v390, %v602
      %v659 = vsub.f32 %v501, %v603
      %v660 = vsub.f32 %v503, %v604
      %v661 = vsub.f32 %v394, %v601
      %v662 = vsub.f32 %v396, %v602
      %v663 = vsub.f32 %v507, %v603
      %v664 = vsub.f32 %v509, %v604
      %v665 = vsub.f32 %v398, %v601
      %v666 = vsub.f32 %v400, %v602
      %v667 = vsub.f32 %v511, %v603
      %v668 = vsub.f32 %v513, %v604
      %v669 = vmul.f32 %v605, %v605
      %v670 = vmul.f32 %v606, %v606
      %v671 = vmul.f32 %v607, %v607
      %v672 = vmul.f32 %v608, %v608
      %v673 = vmul.f32 %v609, %v609
      %v674 = vmul.f32 %v610, %v610
      %v675 = vmul.f32 %v611, %v611
      %v676 = vmul.f32 %v612, %v612
      %v677 = vmul.f32 %v613, %v613
      %v678 = vmul.f32 %v614, %v614
      %v679 = vmul.f32 %v615, %v615
      %v680 = vmul.f32 %v616, %v616
      %v681 = vmul.f32 %v617, %v617
      %v682 = vmul.f32 %v618, %v618
      %v683 = vmul.f32 %v619, %v619
      %v684 = vmul.f32 %v620, %v620
      %v685 = vmul.f32 %v621, %v621
      %v686 = vmul.f32 %v622, %v622
      %v687 = vmul.f32 %v623, %v623
      %v688 = vmul.f32 %v624, %v624
      %v689 = vmul.f32 %v625, %v625
      %v690 = vmul.f32 %v626, %v626
      %v691 = vmul.f32 %v627, %v627
      %v692 = vmul.f32 %v628, %v628
      %v693 = vmul.f32 %v629, %v629
      %v694 = vmul.f32 %v630, %v630
      %v695 = vmul.f32 %v631, %v631
      %v696 = vmul.f32 %v632, %v632
      %v697 = vmul.f32 %v633, %v633
      %v698 = vmul.f32 %v634, %v634
      %v699 = vmul.f32 %v635, %v635
      %v700 = vmul.f32 %v636, %v636
      %v701 = vmul.f32 %v637, %v637
      %v702 = vmul.f32 %v638, %v638
      %v703 = vmul.f32 %v639, %v639
      %v704 = vmul.f32 %v640, %v640
      %v705 = vmul.f32 %v641, %v641
      %v706 = vmul.f32 %v642, %v642
      %v707 = vmul.f32 %v643, %v643
      %v708 = vmul.f32 %v644, %v644
      %v709 = vmul.f32 %v645, %v645
      %v710 = vmul.f32 %v646, %v646
      %v711 = vmul.f32 %v647, %v647
      %v712 = vmul.f32 %v648, %v648
      %v713 = vmul.f32 %v649, %v649
      %v714 = vmul.f32 %v650, %v650
      %v715 = vmul.f32 %v651, %v651
      %v716 = vmul.f32 %v652, %v652
      %v717 = vmul.f32 %v653, %v653
      %v718 = vmul.f32 %v654, %v654
      %v719 = vmul.f32 %v655, %v655
      %v720 = vmul.f32 %v656, %v656
      %v721 = vmul.f32 %v657, %v657
      %v722 = vmul.f32 %v658, %v658
      %v723 = vmul.f32 %v659, %v659
      %v724 = vmul.f32 %v660, %v660
      %v725 = vmul.f32 %v661, %v661
      %v726 = vmul.f32 %v662, %v662
      %v727 = vmul.f32 %v663, %v663
      %v728 = vmul.f32 %v664, %v664
      %v729 = vmul.f32 %v665, %v665
      %v730 = vmul.f32 %v666, %v666
      %v731 = vmul.f32 %v667, %v667
      %v732 = vmul.f32 %v668, %v668
      %v733 = vadd.f32 %v669, %v673
      %v734 = vadd.f32 %v733, %v677
      %v735 = vadd.f32 %v734, %v681
      %v736 = vadd.f32 %v735, %v685
      %v737 = vadd.f32 %v736, %v689
      %v738 = vadd.f32 %v737, %v693
      %v739 = vadd.f32 %v738, %v697
      %v740 = vadd.f32 %v739, %v701
      %v741 = vadd.f32 %v740, %v705
      %v742 = vadd.f32 %v741, %v709
      %v743 = vadd.f32 %v742, %v713
      %v744 = vadd.f32 %v743, %v717
      %v745 = vadd.f32 %v744, %v721
      %v746 = vadd.f32 %v745, %v725
      %v747 = vadd.f32 %v746, %v729
      %v748 = vrot.slane %v747, 4
      %v749 = vadd.f32 %v747, %v748
      %v750 = vrot.slane %v749, 2
      %v751 = vadd.f32 %v749, %v750
      %v752 = vrot.slane %v751, 1
      %v753 = vadd.f32 %v751, %v752
      %v754 = vadd.f32 %v670, %v674
      %v755 = vadd.f32 %v754, %v678
      %v756 = vadd.f32 %v755, %v682
      %v757 = vadd.f32 %v756, %v686
      %v758 = vadd.f32 %v757, %v690
      %v759 = vadd.f32 %v758, %v694
      %v760 = vadd.f32 %v759, %v698
      %v761 = vadd.f32 %v760, %v702
      %v762 = vadd.f32 %v761, %v706
      %v763 = vadd.f32 %v762, %v710
      %v764 = vadd.f32 %v763, %v714
      %v765 = vadd.f32 %v764, %v718
      %v766 = vadd.f32 %v765, %v722
      %v767 = vadd.f32 %v766, %v726
      %v768 = vadd.f32 %v767, %v730
      %v769 = vrot.slane %v768, 4
      %v770 = vadd.f32 %v768, %v769
      %v771 = vrot.slane %v770, 2
      %v772 = vadd.f32 %v770, %v771
      %v773 = vrot.slane %v772, 1
      %v774 = vadd.f32 %v772, %v773
      %v775 = vadd.f32 %v671, %v675
      %v776 = vadd.f32 %v775, %v679
      %v777 = vadd.f32 %v776, %v683
      %v778 = vadd.f32 %v777, %v687
      %v779 = vadd.f32 %v778, %v691
      %v780 = vadd.f32 %v779, %v695
      %v781 = vadd.f32 %v780, %v699
      %v782 = vadd.f32 %v781, %v703
      %v783 = vadd.f32 %v782, %v707
      %v784 = vadd.f32 %v783, %v711
      %v785 = vadd.f32 %v784, %v715
      %v786 = vadd.f32 %v785, %v719
      %v787 = vadd.f32 %v786, %v723
      %v788 = vadd.f32 %v787, %v727
      %v789 = vadd.f32 %v788, %v731
      %v790 = vrot.slane %v789, 4
      %v791 = vadd.f32 %v789, %v790
      %v792 = vrot.slane %v791, 2
      %v793 = vadd.f32 %v791, %v792
      %v794 = vrot.slane %v793, 1
      %v795 = vadd.f32 %v793, %v794
      %v796 = vadd.f32 %v672, %v676
      %v797 = vadd.f32 %v796, %v680
      %v798 = vadd.f32 %v797, %v684
      %v799 = vadd.f32 %v798, %v688
      %v800 = vadd.f32 %v799, %v692
      %v801 = vadd.f32 %v800, %v696
      %v802 = vadd.f32 %v801, %v700
      %v803 = vadd.f32 %v802, %v704
      %v804 = vadd.f32 %v803, %v708
      %v805 = vadd.f32 %v804, %v712
      %v806 = vadd.f32 %v805, %v716
      %v807 = vadd.f32 %v806, %v720
      %v808 = vadd.f32 %v807, %v724
      %v809 = vadd.f32 %v808, %v728
      %v810 = vadd.f32 %v809, %v732
      %v811 = vrot.slane %v810, 4
      %v812 = vadd.f32 %v810, %v811
      %v813 = vrot.slane %v812, 2
      %v814 = vadd.f32 %v812, %v813
      %v815 = vrot.slane %v814, 1
      %v816 = vadd.f32 %v814, %v815
      %v817 = vmul.f32 %v753, 0.0078125
      %v818 = vmul.f32 %v774, 0.0078125
      %v819 = vmul.f32 %v795, 0.0078125
      %v820 = vmul.f32 %v816, 0.0078125
      %v821 = vadd.f32 %v817, 1e-05
      %v822 = vadd.f32 %v818, 1e-05
      %v823 = vadd.f32 %v819, 1e-05
      %v824 = vadd.f32 %v820, 1e-05
      %v825 = vrsqrt.pop %v821
      %v826 = vrsqrt.pop %v822
      %v827 = vrsqrt.pop %v823
      %v828 = vrsqrt.pop %v824
      %v833 = vcombine.low %v825, %v826
      %v834 = vcombine.low %v827, %v828
      %v836 = vunpack.c.l.s4 1966171168
      %v837 = vunpack.c.0.s8 %v836
      %v838 = vlaneseq
      %v839 = vshrl.u32 %v838, 7
      %v840 = vsub.s32 %v837, %v839
      %v841 = vrot.slane %v833, %v840
      %v843 = vunpack.c.l.s4 1966171168
      %v844 = vunpack.c.0.s8 %v843
      %v845 = vlaneseq
      %v846 = vshrl.u32 %v845, 7
      %v847 = vsub.s32 %v844, %v846
      %v848 = vrot.slane %v834, %v847
      %v849 = vcombine.low %v841, %v848
      %v851 = vunpack.c.l.s4 1966171168
      %v852 = vunpack.c.0.s8 %v851
      %v853 = vlaneseq
      %v854 = vshrl.u32 %v853, 7
      %v855 = vsub.s32 %v852, %v854
      %v856 = vrot.slane %v849, %v855
      %v858 = vmul.f32 %v515, %v856
      %v860 = vlaneseq
      %v861 = vshrl.u32 %v860, 7
      %v862 = vsub.s32 0, %v861
      %v863 = vrot.slane %v858, %v862
      %v864 = vlaneseq
      %v865 = vshrl.u32 %v864, 7
      %v866 = vsub.s32 1, %v865
      %v867 = vrot.slane %v858, %v866
      %v868 = vlaneseq
      %v869 = vshrl.u32 %v868, 7
      %v870 = vsub.s32 2, %v869
      %v871 = vrot.slane %v858, %v870
      %v872 = vlaneseq
      %v873 = vshrl.u32 %v872, 7
      %v874 = vsub.s32 3, %v873
      %v875 = vrot.slane %v858, %v874
      %v880 = vmul.f32 %v605, %v863
      %v881 = vmul.f32 %v606, %v867
      %v882 = vmul.f32 %v607, %v871
      %v883 = vmul.f32 %v608, %v875
      %v884 = vmul.f32 %v609, %v863
      %v885 = vmul.f32 %v610, %v867
      %v886 = vmul.f32 %v611, %v871
      %v887 = vmul.f32 %v612, %v875
      %v888 = vmul.f32 %v613, %v863
      %v889 = vmul.f32 %v614, %v867
      %v890 = vmul.f32 %v615, %v871
      %v891 = vmul.f32 %v616, %v875
      %v892 = vmul.f32 %v617, %v863
      %v893 = vmul.f32 %v618, %v867
      %v894 = vmul.f32 %v619, %v871
      %v895 = vmul.f32 %v620, %v875
      %v896 = vmul.f32 %v621, %v863
      %v897 = vmul.f32 %v622, %v867
      %v898 = vmul.f32 %v623, %v871
      %v899 = vmul.f32 %v624, %v875
      %v900 = vmul.f32 %v625, %v863
      %v901 = vmul.f32 %v626, %v867
      %v902 = vmul.f32 %v627, %v871
      %v903 = vmul.f32 %v628, %v875
      %v904 = vmul.f32 %v629, %v863
      %v905 = vmul.f32 %v630, %v867
      %v906 = vmul.f32 %v631, %v871
      %v907 = vmul.f32 %v632, %v875
      %v908 = vmul.f32 %v633, %v863
      %v909 = vmul.f32 %v634, %v867
      %v910 = vmul.f32 %v635, %v871
      %v911 = vmul.f32 %v636, %v875
      %v912 = vmul.f32 %v637, %v863
      %v913 = vmul.f32 %v638, %v867
      %v914 = vmul.f32 %v639, %v871
      %v915 = vmul.f32 %v640, %v875
      %v916 = vmul.f32 %v641, %v863
      %v917 = vmul.f32 %v642, %v867
      %v918 = vmul.f32 %v643, %v871
      %v919 = vmul.f32 %v644, %v875
      %v920 = vmul.f32 %v645, %v863
      %v921 = vmul.f32 %v646, %v867
      %v922 = vmul.f32 %v647, %v871
      %v923 = vmul.f32 %v648, %v875
      %v924 = vmul.f32 %v649, %v863
      %v925 = vmul.f32 %v650, %v867
      %v926 = vmul.f32 %v651, %v871
      %v927 = vmul.f32 %v652, %v875
      %v928 = vmul.f32 %v653, %v863
      %v929 = vmul.f32 %v654, %v867
      %v930 = vmul.f32 %v655, %v871
      %v931 = vmul.f32 %v656, %v875
      %v932 = vmul.f32 %v657, %v863
      %v933 = vmul.f32 %v658, %v867
      %v934 = vmul.f32 %v659, %v871
      %v935 = vmul.f32 %v660, %v875
      %v936 = vmul.f32 %v661, %v863
      %v937 = vmul.f32 %v662, %v867
      %v938 = vmul.f32 %v663, %v871
      %v939 = vmul.f32 %v664, %v875
      %v940 = vmul.f32 %v665, %v863
      %v941 = vmul.f32 %v666, %v867
      %v942 = vmul.f32 %v667, %v871
      %v943 = vmul.f32 %v668, %v875
      %v945 = vlaneseq
      %v946 = vshrl.u32 %v945, 7
      %v947 = vsub.s32 0, %v946
      %v948 = vrot.slane %v516, %v947
      %v949 = vlaneseq
      %v950 = vshrl.u32 %v949, 7
      %v951 = vsub.s32 1, %v950
      %v952 = vrot.slane %v516, %v951
      %v953 = vlaneseq
      %v954 = vshrl.u32 %v953, 7
      %v955 = vsub.s32 2, %v954
      %v956 = vrot.slane %v516, %v955
      %v957 = vlaneseq
      %v958 = vshrl.u32 %v957, 7
      %v959 = vsub.s32 3, %v958
      %v960 = vrot.slane %v516, %v959
      %v965 = vadd.f32 %v880, %v948
      %v966 = vadd.f32 %v881, %v952
      %v967 = vadd.f32 %v882, %v956
      %v968 = vadd.f32 %v883, %v960
      %v969 = vadd.f32 %v884, %v948
      %v970 = vadd.f32 %v885, %v952
      %v971 = vadd.f32 %v886, %v956
      %v972 = vadd.f32 %v887, %v960
      %v973 = vadd.f32 %v888, %v948
      %v974 = vadd.f32 %v889, %v952
      %v975 = vadd.f32 %v890, %v956
      %v976 = vadd.f32 %v891, %v960
      %v977 = vadd.f32 %v892, %v948
      %v978 = vadd.f32 %v893, %v952
      %v979 = vadd.f32 %v894, %v956
      %v980 = vadd.f32 %v895, %v960
      %v981 = vadd.f32 %v896, %v948
      %v982 = vadd.f32 %v897, %v952
      %v983 = vadd.f32 %v898, %v956
      %v984 = vadd.f32 %v899, %v960
      %v985 = vadd.f32 %v900, %v948
      %v986 = vadd.f32 %v901, %v952
      %v987 = vadd.f32 %v902, %v956
      %v988 = vadd.f32 %v903, %v960
      %v989 = vadd.f32 %v904, %v948
      %v990 = vadd.f32 %v905, %v952
      %v991 = vadd.f32 %v906, %v956
      %v992 = vadd.f32 %v907, %v960
      %v993 = vadd.f32 %v908, %v948
      %v994 = vadd.f32 %v909, %v952
      %v995 = vadd.f32 %v910, %v956
      %v996 = vadd.f32 %v911, %v960
      %v997 = vadd.f32 %v912, %v948
      %v998 = vadd.f32 %v913, %v952
      %v999 = vadd.f32 %v914, %v956
      %v1000 = vadd.f32 %v915, %v960
      %v1001 = vadd.f32 %v916, %v948
      %v1002 = vadd.f32 %v917, %v952
      %v1003 = vadd.f32 %v918, %v956
      %v1004 = vadd.f32 %v919, %v960
      %v1005 = vadd.f32 %v920, %v948
      %v1006 = vadd.f32 %v921, %v952
      %v1007 = vadd.f32 %v922, %v956
      %v1008 = vadd.f32 %v923, %v960
      %v1009 = vadd.f32 %v924, %v948
      %v1010 = vadd.f32 %v925, %v952
      %v1011 = vadd.f32 %v926, %v956
      %v1012 = vadd.f32 %v927, %v960
      %v1013 = vadd.f32 %v928, %v948
      %v1014 = vadd.f32 %v929, %v952
      %v1015 = vadd.f32 %v930, %v956
      %v1016 = vadd.f32 %v931, %v960
      %v1017 = vadd.f32 %v932, %v948
      %v1018 = vadd.f32 %v933, %v952
      %v1019 = vadd.f32 %v934, %v956
      %v1020 = vadd.f32 %v935, %v960
      %v1021 = vadd.f32 %v936, %v948
      %v1022 = vadd.f32 %v937, %v952
      %v1023 = vadd.f32 %v938, %v956
      %v1024 = vadd.f32 %v939, %v960
      %v1025 = vadd.f32 %v940, %v948
      %v1026 = vadd.f32 %v941, %v952
      %v1027 = vadd.f32 %v942, %v956
      %v1028 = vadd.f32 %v943, %v960
      %v1029 = vmax.f32 %v965, 0.0
      %v1030 = vmax.f32 %v966, 0.0
      %v1031 = vmax.f32 %v967, 0.0
      %v1032 = vmax.f32 %v968, 0.0
      %v1033 = vmax.f32 %v969, 0.0
      %v1034 = vmax.f32 %v970, 0.0
      %v1035 = vmax.f32 %v971, 0.0
      %v1036 = vmax.f32 %v972, 0.0
      %v1037 = vmax.f32 %v973, 0.0
      %v1038 = vmax.f32 %v974, 0.0
      %v1039 = vmax.f32 %v975, 0.0
      %v1040 = vmax.f32 %v976, 0.0
      %v1041 = vmax.f32 %v977, 0.0
      %v1042 = vmax.f32 %v978, 0.0
      %v1043 = vmax.f32 %v979, 0.0
      %v1044 = vmax.f32 %v980, 0.0
      %v1045 = vmax.f32 %v981, 0.0
      %v1046 = vmax.f32 %v982, 0.0
      %v1047 = vmax.f32 %v983, 0.0
      %v1048 = vmax.f32 %v984, 0.0
      %v1049 = vmax.f32 %v985, 0.0
      %v1050 = vmax.f32 %v986, 0.0
      %v1051 = vmax.f32 %v987, 0.0
      %v1052 = vmax.f32 %v988, 0.0
      %v1053 = vmax.f32 %v989, 0.0
      %v1054 = vmax.f32 %v990, 0.0
      %v1055 = vmax.f32 %v991, 0.0
      %v1056 = vmax.f32 %v992, 0.0
      %v1057 = vmax.f32 %v993, 0.0
      %v1058 = vmax.f32 %v994, 0.0
      %v1059 = vmax.f32 %v995, 0.0
      %v1060 = vmax.f32 %v996, 0.0
      %v1061 = vmax.f32 %v997, 0.0
      %v1062 = vmax.f32 %v998, 0.0
      %v1063 = vmax.f32 %v999, 0.0
      %v1064 = vmax.f32 %v1000, 0.0
      %v1065 = vmax.f32 %v1001, 0.0
      %v1066 = vmax.f32 %v1002, 0.0
      %v1067 = vmax.f32 %v1003, 0.0
      %v1068 = vmax.f32 %v1004, 0.0
      %v1069 = vmax.f32 %v1005, 0.0
      %v1070 = vmax.f32 %v1006, 0.0
      %v1071 = vmax.f32 %v1007, 0.0
      %v1072 = vmax.f32 %v1008, 0.0
      %v1073 = vmax.f32 %v1009, 0.0
      %v1074 = vmax.f32 %v1010, 0.0
      %v1075 = vmax.f32 %v1011, 0.0
      %v1076 = vmax.f32 %v1012, 0.0
      %v1077 = vmax.f32 %v1013, 0.0
      %v1078 = vmax.f32 %v1014, 0.0
      %v1079 = vmax.f32 %v1015, 0.0
      %v1080 = vmax.f32 %v1016, 0.0
      %v1081 = vmax.f32 %v1017, 0.0
      %v1082 = vmax.f32 %v1018, 0.0
      %v1083 = vmax.f32 %v1019, 0.0
      %v1084 = vmax.f32 %v1020, 0.0
      %v1085 = vmax.f32 %v1021, 0.0
      %v1086 = vmax.f32 %v1022, 0.0
      %v1087 = vmax.f32 %v1023, 0.0
      %v1088 = vmax.f32 %v1024, 0.0
      %v1089 = vmax.f32 %v1025, 0.0
      %v1090 = vmax.f32 %v1026, 0.0
      %v1091 = vmax.f32 %v1027, 0.0
      %v1092 = vmax.f32 %v1028, 0.0
      %v1093 = vpack.c.bf16 %v1033, %v1029
      %v1094 = vpack.c.bf16 %v1034, %v1030
      %v1095 = vpack.c.bf16 %v1035, %v1031
      %v1096 = vpack.c.bf16 %v1036, %v1032
      %v1097 = vpack.c.bf16 %v1041, %v1037
      %v1098 = vpack.c.bf16 %v1042, %v1038
      %v1099 = vpack.c.bf16 %v1043, %v1039
      %v1100 = vpack.c.bf16 %v1044, %v1040
      %v1101 = vpack.c.bf16 %v1049, %v1045
      %v1102 = vpack.c.bf16 %v1050, %v1046
      %v1103 = vpack.c.bf16 %v1051, %v1047
      %v1104 = vpack.c.bf16 %v1052, %v1048
      %v1105 = vpack.c.bf16 %v1057, %v1053
      %v1106 = vpack.c.bf16 %v1058, %v1054
      %v1107 = vpack.c.bf16 %v1059, %v1055
      %v1108 = vpack.c.bf16 %v1060, %v1056
      %v1109 = vpack.c.bf16 %v1065, %v1061
      %v1110 = vpack.c.bf16 %v1066, %v1062
      %v1111 = vpack.c.bf16 %v1067, %v1063
      %v1112 = vpack.c.bf16 %v1068, %v1064
      %v1113 = vpack.c.bf16 %v1073, %v1069
      %v1114 = vpack.c.bf16 %v1074, %v1070
      %v1115 = vpack.c.bf16 %v1075, %v1071
      %v1116 = vpack.c.bf16 %v1076, %v1072
      %v1117 = vpack.c.bf16 %v1081, %v1077
      %v1118 = vpack.c.bf16 %v1082, %v1078
      %v1119 = vpack.c.bf16 %v1083, %v1079
      %v1120 = vpack.c.bf16 %v1084, %v1080
      %v1121 = vpack.c.bf16 %v1089, %v1085
      %v1122 = vpack.c.bf16 %v1090, %v1086
      %v1123 = vpack.c.bf16 %v1091, %v1087
      %v1124 = vpack.c.bf16 %v1092, %v1088
      %1125 = vst [vmem:[#allocation2] sm:$0xff] %v1093
      %1126 = vst [vmem:[#allocation2 + $0x8] sm:$0xff] %v1094
      %1127 = vst [vmem:[#allocation2 + $0x10] sm:$0xff] %v1095
      %1128 = vst [vmem:[#allocation2 + $0x18] sm:$0xff] %v1096
      %1129 = vst [vmem:[#allocation2 + $0x20] sm:$0xff] %v1097
      %1130 = vst [vmem:[#allocation2 + $0x28] sm:$0xff] %v1098
      %1131 = vst [vmem:[#allocation2 + $0x30] sm:$0xff] %v1099
      %1132 = vst [vmem:[#allocation2 + $0x38] sm:$0xff] %v1100
      %1133 = vst [vmem:[#allocation2 + $0x40] sm:$0xff] %v1101
      %1134 = vst [vmem:[#allocation2 + $0x48] sm:$0xff] %v1102
      %1135 = vst [vmem:[#allocation2 + $0x50] sm:$0xff] %v1103
      %1136 = vst [vmem:[#allocation2 + $0x58] sm:$0xff] %v1104
      %1137 = vst [vmem:[#allocation2 + $0x60] sm:$0xff] %v1105
      %1138 = vst [vmem:[#allocation2 + $0x68] sm:$0xff] %v1106
      %1139 = vst [vmem:[#allocation2 + $0x70] sm:$0xff] %v1107
      %1140 = vst [vmem:[#allocation2 + $0x78] sm:$0xff] %v1108
      %1141 = vst [vmem:[#allocation2 + $0x80] sm:$0xff] %v1109
      %1142 = vst [vmem:[#allocation2 + $0x88] sm:$0xff] %v1110
      %1143 = vst [vmem:[#allocation2 + $0x90] sm:$0xff] %v1111
      %1144 = vst [vmem:[#allocation2 + $0x98] sm:$0xff] %v1112
      %1145 = vst [vmem:[#allocation2 + $0xa0] sm:$0xff] %v1113
      %1146 = vst [vmem:[#allocation2 + $0xa8] sm:$0xff] %v1114
      %1147 = vst [vmem:[#allocation2 + $0xb0] sm:$0xff] %v1115
      %1148 = vst [vmem:[#allocation2 + $0xb8] sm:$0xff] %v1116
      %1149 = vst [vmem:[#allocation2 + $0xc0] sm:$0xff] %v1117
      %1150 = vst [vmem:[#allocation2 + $0xc8] sm:$0xff] %v1118
      %1151 = vst [vmem:[#allocation2 + $0xd0] sm:$0xff] %v1119
      %1152 = vst [vmem:[#allocation2 + $0xd8] sm:$0xff] %v1120
      %1153 = vst [vmem:[#allocation2 + $0xe0] sm:$0xff] %v1121
      %1154 = vst [vmem:[#allocation2 + $0xe8] sm:$0xff] %v1122
      %1155 = vst [vmem:[#allocation2 + $0xf0] sm:$0xff] %v1123
      %1156 = vst [vmem:[#allocation2 + $0xf8] sm:$0xff] %v1124
    $region45: #{expander_forward.1} parent=1 // pred_fallthru
      _
    %v1157 = vld [vmem:[#allocation2] sm:$0xff]
    %v1158 = vld [vmem:[#allocation2 + $0x8] sm:$0xff]
    %v1159 = vld [vmem:[#allocation2 + $0x10] sm:$0xff]
    %v1160 = vld [vmem:[#allocation2 + $0x18] sm:$0xff]
    %v1161 = vld [vmem:[#allocation2 + $0x20] sm:$0xff]
    %v1162 = vld [vmem:[#allocation2 + $0x28] sm:$0xff]
    %v1163 = vld [vmem:[#allocation2 + $0x30] sm:$0xff]
    %v1164 = vld [vmem:[#allocation2 + $0x38] sm:$0xff]
    %v1165 = vld [vmem:[#allocation2 + $0x40] sm:$0xff]
    %v1166 = vld [vmem:[#allocation2 + $0x48] sm:$0xff]
    %v1167 = vld [vmem:[#allocation2 + $0x50] sm:$0xff]
    %v1168 = vld [vmem:[#allocation2 + $0x58] sm:$0xff]
    %v1169 = vld [vmem:[#allocation2 + $0x60] sm:$0xff]
    %v1170 = vld [vmem:[#allocation2 + $0x68] sm:$0xff]
    %v1171 = vld [vmem:[#allocation2 + $0x70] sm:$0xff]
    %v1172 = vld [vmem:[#allocation2 + $0x78] sm:$0xff]
    %v1173 = vld [vmem:[#allocation2 + $0x80] sm:$0xff]
    %v1174 = vld [vmem:[#allocation2 + $0x88] sm:$0xff]
    %v1175 = vld [vmem:[#allocation2 + $0x90] sm:$0xff]
    %v1176 = vld [vmem:[#allocation2 + $0x98] sm:$0xff]
    %v1177 = vld [vmem:[#allocation2 + $0xa0] sm:$0xff]
    %v1178 = vld [vmem:[#allocation2 + $0xa8] sm:$0xff]
    %v1179 = vld [vmem:[#allocation2 + $0xb0] sm:$0xff]
    %v1180 = vld [vmem:[#allocation2 + $0xb8] sm:$0xff]
    %v1181 = vld [vmem:[#allocation2 + $0xc0] sm:$0xff]
    %v1182 = vld [vmem:[#allocation2 + $0xc8] sm:$0xff]
    %v1183 = vld [vmem:[#allocation2 + $0xd0] sm:$0xff]
    %v1184 = vld [vmem:[#allocation2 + $0xd8] sm:$0xff]
    %v1185 = vld [vmem:[#allocation2 + $0xe0] sm:$0xff]
    %v1186 = vld [vmem:[#allocation2 + $0xe8] sm:$0xff]
    %v1187 = vld [vmem:[#allocation2 + $0xf0] sm:$0xff]
    %v1188 = vld [vmem:[#allocation2 + $0xf8] sm:$0xff]
    %v1189 = vld [vmem:[#allocation8] sm:$0xf]
    %v1190 = vld [vmem:[#allocation8 + $0x4] sm:$0xf]
    %v1191 = vld [vmem:[#allocation8 + $0x8] sm:$0xf]
    %v1192 = vld [vmem:[#allocation8 + $0xc] sm:$0xf]
    %v1193 = vld [vmem:[#allocation8 + $0x10] sm:$0xf]
    %v1194 = vld [vmem:[#allocation8 + $0x14] sm:$0xf]
    %v1195 = vld [vmem:[#allocation8 + $0x18] sm:$0xf]
    %v1196 = vld [vmem:[#allocation8 + $0x1c] sm:$0xf]
    %v1197 = vld [vmem:[#allocation8 + $0x20] sm:$0xf]
    %v1198 = vld [vmem:[#allocation8 + $0x24] sm:$0xf]
    %v1199 = vld [vmem:[#allocation8 + $0x28] sm:$0xf]
    %v1200 = vld [vmem:[#allocation8 + $0x2c] sm:$0xf]
    %v1201 = vld [vmem:[#allocation8 + $0x30] sm:$0xf]
    %v1202 = vld [vmem:[#allocation8 + $0x34] sm:$0xf]
    %v1203 = vld [vmem:[#allocation8 + $0x38] sm:$0xf]
    %v1204 = vld [vmem:[#allocation8 + $0x3c] sm:$0xf]
    %v1205 = vld [vmem:[#allocation8 + $0x40] sm:$0xf]
    %v1206 = vld [vmem:[#allocation8 + $0x44] sm:$0xf]
    %v1207 = vld [vmem:[#allocation8 + $0x48] sm:$0xf]
    %v1208 = vld [vmem:[#allocation8 + $0x4c] sm:$0xf]
    %v1209 = vld [vmem:[#allocation8 + $0x50] sm:$0xf]
    %v1210 = vld [vmem:[#allocation8 + $0x54] sm:$0xf]
    %v1211 = vld [vmem:[#allocation8 + $0x58] sm:$0xf]
    %v1212 = vld [vmem:[#allocation8 + $0x5c] sm:$0xf]
    %v1213 = vld [vmem:[#allocation8 + $0x60] sm:$0xf]
    %v1214 = vld [vmem:[#allocation8 + $0x64] sm:$0xf]
    %v1215 = vld [vmem:[#allocation8 + $0x68] sm:$0xf]
    %v1216 = vld [vmem:[#allocation8 + $0x6c] sm:$0xf]
    %v1217 = vld [vmem:[#allocation8 + $0x70] sm:$0xf]
    %v1218 = vld [vmem:[#allocation8 + $0x74] sm:$0xf]
    %v1219 = vld [vmem:[#allocation8 + $0x78] sm:$0xf]
    %v1220 = vld [vmem:[#allocation8 + $0x7c] sm:$0xf]
    %v1221 = vld [vmem:[#allocation8 + $0x80] sm:$0xf]
    %v1222 = vld [vmem:[#allocation8 + $0x84] sm:$0xf]
    %v1223 = vld [vmem:[#allocation8 + $0x88] sm:$0xf]
    %v1224 = vld [vmem:[#allocation8 + $0x8c] sm:$0xf]
    %v1225 = vld [vmem:[#allocation8 + $0x90] sm:$0xf]
    %v1226 = vld [vmem:[#allocation8 + $0x94] sm:$0xf]
    %v1227 = vld [vmem:[#allocation8 + $0x98] sm:$0xf]
    %v1228 = vld [vmem:[#allocation8 + $0x9c] sm:$0xf]
    %v1229 = vld [vmem:[#allocation8 + $0xa0] sm:$0xf]
    %v1230 = vld [vmem:[#allocation8 + $0xa4] sm:$0xf]
    %v1231 = vld [vmem:[#allocation8 + $0xa8] sm:$0xf]
    %v1232 = vld [vmem:[#allocation8 + $0xac] sm:$0xf]
    %v1233 = vld [vmem:[#allocation8 + $0xb0] sm:$0xf]
    %v1234 = vld [vmem:[#allocation8 + $0xb4] sm:$0xf]
    %v1235 = vld [vmem:[#allocation8 + $0xb8] sm:$0xf]
    %v1236 = vld [vmem:[#allocation8 + $0xbc] sm:$0xf]
    %v1237 = vld [vmem:[#allocation8 + $0xc0] sm:$0xf]
    %v1238 = vld [vmem:[#allocation8 + $0xc4] sm:$0xf]
    %v1239 = vld [vmem:[#allocation8 + $0xc8] sm:$0xf]
    %v1240 = vld [vmem:[#allocation8 + $0xcc] sm:$0xf]
    %v1241 = vld [vmem:[#allocation8 + $0xd0] sm:$0xf]
    %v1242 = vld [vmem:[#allocation8 + $0xd4] sm:$0xf]
    %v1243 = vld [vmem:[#allocation8 + $0xd8] sm:$0xf]
    %v1244 = vld [vmem:[#allocation8 + $0xdc] sm:$0xf]
    %v1245 = vld [vmem:[#allocation8 + $0xe0] sm:$0xf]
    %v1246 = vld [vmem:[#allocation8 + $0xe4] sm:$0xf]
    %v1247 = vld [vmem:[#allocation8 + $0xe8] sm:$0xf]
    %v1248 = vld [vmem:[#allocation8 + $0xec] sm:$0xf]
    %v1249 = vld [vmem:[#allocation8 + $0xf0] sm:$0xf]
    %v1250 = vld [vmem:[#allocation8 + $0xf4] sm:$0xf]
    %v1251 = vld [vmem:[#allocation8 + $0xf8] sm:$0xf]
    %v1252 = vld [vmem:[#allocation8 + $0xfc] sm:$0xf]
    %v1317 = vunpack.c.l.b16 %v1189
    %v1318 = vunpack.c.l.b16 %v1190
    %v1319 = vunpack.c.l.b16 %v1191
    %v1320 = vunpack.c.l.b16 %v1192
    %v1321 = vunpack.c.l.b16 %v1193
    %v1322 = vunpack.c.l.b16 %v1194
    %v1323 = vunpack.c.l.b16 %v1195
    %v1324 = vunpack.c.l.b16 %v1196
    %v1325 = vunpack.c.l.b16 %v1197
    %v1326 = vunpack.c.l.b16 %v1198
    %v1327 = vunpack.c.l.b16 %v1199
    %v1328 = vunpack.c.l.b16 %v1200
    %v1329 = vunpack.c.l.b16 %v1201
    %v1330 = vunpack.c.l.b16 %v1202
    %v1331 = vunpack.c.l.b16 %v1203
    %v1332 = vunpack.c.l.b16 %v1204
    %v1333 = vunpack.c.l.b16 %v1205
    %v1334 = vunpack.c.l.b16 %v1206
    %v1335 = vunpack.c.l.b16 %v1207
    %v1336 = vunpack.c.l.b16 %v1208
    %v1337 = vunpack.c.l.b16 %v1209
    %v1338 = vunpack.c.l.b16 %v1210
    %v1339 = vunpack.c.l.b16 %v1211
    %v1340 = vunpack.c.l.b16 %v1212
    %v1341 = vunpack.c.l.b16 %v1213
    %v1342 = vunpack.c.l.b16 %v1214
    %v1343 = vunpack.c.l.b16 %v1215
    %v1344 = vunpack.c.l.b16 %v1216
    %v1345 = vunpack.c.l.b16 %v1217
    %v1346 = vunpack.c.l.b16 %v1218
    %v1347 = vunpack.c.l.b16 %v1219
    %v1348 = vunpack.c.l.b16 %v1220
    %v1349 = vunpack.c.l.b16 %v1221
    %v1350 = vunpack.c.l.b16 %v1222
    %v1351 = vunpack.c.l.b16 %v1223
    %v1352 = vunpack.c.l.b16 %v1224
    %v1353 = vunpack.c.l.b16 %v1225
    %v1354 = vunpack.c.l.b16 %v1226
    %v1355 = vunpack.c.l.b16 %v1227
    %v1356 = vunpack.c.l.b16 %v1228
    %v1357 = vunpack.c.l.b16 %v1229
    %v1358 = vunpack.c.l.b16 %v1230
    %v1359 = vunpack.c.l.b16 %v1231
    %v1360 = vunpack.c.l.b16 %v1232
    %v1361 = vunpack.c.l.b16 %v1233
    %v1362 = vunpack.c.l.b16 %v1234
    %v1363 = vunpack.c.l.b16 %v1235
    %v1364 = vunpack.c.l.b16 %v1236
    %v1365 = vunpack.c.l.b16 %v1237
    %v1366 = vunpack.c.l.b16 %v1238
    %v1367 = vunpack.c.l.b16 %v1239
    %v1368 = vunpack.c.l.b16 %v1240
    %v1369 = vunpack.c.l.b16 %v1241
    %v1370 = vunpack.c.l.b16 %v1242
    %v1371 = vunpack.c.l.b16 %v1243
    %v1372 = vunpack.c.l.b16 %v1244
    %v1373 = vunpack.c.l.b16 %v1245
    %v1374 = vunpack.c.l.b16 %v1246
    %v1375 = vunpack.c.l.b16 %v1247
    %v1376 = vunpack.c.l.b16 %v1248
    %v1377 = vunpack.c.l.b16 %v1249
    %v1378 = vunpack.c.l.b16 %v1250
    %v1379 = vunpack.c.l.b16 %v1251
    %v1380 = vunpack.c.l.b16 %v1252
    %v1381 = vpack.c.b16 %v1318, %v1317
    %v1382 = vpack.c.b16 %v1320, %v1319
    %v1383 = vpack.c.b16 %v1322, %v1321
    %v1384 = vpack.c.b16 %v1324, %v1323
    %v1385 = vpack.c.b16 %v1326, %v1325
    %v1386 = vpack.c.b16 %v1328, %v1327
    %v1387 = vpack.c.b16 %v1330, %v1329
    %v1388 = vpack.c.b16 %v1332, %v1331
    %v1389 = vpack.c.b16 %v1334, %v1333
    %v1390 = vpack.c.b16 %v1336, %v1335
    %v1391 = vpack.c.b16 %v1338, %v1337
    %v1392 = vpack.c.b16 %v1340, %v1339
    %v1393 = vpack.c.b16 %v1342, %v1341
    %v1394 = vpack.c.b16 %v1344, %v1343
    %v1395 = vpack.c.b16 %v1346, %v1345
    %v1396 = vpack.c.b16 %v1348, %v1347
    %v1397 = vpack.c.b16 %v1350, %v1349
    %v1398 = vpack.c.b16 %v1352, %v1351
    %v1399 = vpack.c.b16 %v1354, %v1353
    %v1400 = vpack.c.b16 %v1356, %v1355
    %v1401 = vpack.c.b16 %v1358, %v1357
    %v1402 = vpack.c.b16 %v1360, %v1359
    %v1403 = vpack.c.b16 %v1362, %v1361
    %v1404 = vpack.c.b16 %v1364, %v1363
    %v1405 = vpack.c.b16 %v1366, %v1365
    %v1406 = vpack.c.b16 %v1368, %v1367
    %v1407 = vpack.c.b16 %v1370, %v1369
    %v1408 = vpack.c.b16 %v1372, %v1371
    %v1409 = vpack.c.b16 %v1374, %v1373
    %v1410 = vpack.c.b16 %v1376, %v1375
    %v1411 = vpack.c.b16 %v1378, %v1377
    %v1412 = vpack.c.b16 %v1380, %v1379
    %1445 = vmatprep.subr.bf16.mxu0 0
    %1446 = vmatpush1.bf16.msra.mxu0 %v1381
    %1447 = vmatprep.subr.bf16.mxu0 0
    %1448 = vmatpush1.bf16.msra.mxu0 %v1382
    %1449 = vmatprep.subr.bf16.mxu0 0
    %1450 = vmatpush1.bf16.msra.mxu0 %v1383
    %1451 = vmatprep.subr.bf16.mxu0 0
    %1452 = vmatpush1.bf16.msra.mxu0 %v1384
    %1453 = vmatprep.subr.bf16.mxu0 0
    %1454 = vmatpush1.bf16.msra.mxu0 %v1385
    %1455 = vmatprep.subr.bf16.mxu0 0
    %1456 = vmatpush1.bf16.msra.mxu0 %v1386
    %1457 = vmatprep.subr.bf16.mxu0 0
    %1458 = vmatpush1.bf16.msra.mxu0 %v1387
    %1459 = vmatprep.subr.bf16.mxu0 0
    %1460 = vmatpush1.bf16.msra.mxu0 %v1388
    %1461 = vmatprep.subr.bf16.mxu0 0
    %1462 = vmatpush1.bf16.msra.mxu0 %v1389
    %1463 = vmatprep.subr.bf16.mxu0 0
    %1464 = vmatpush1.bf16.msra.mxu0 %v1390
    %1465 = vmatprep.subr.bf16.mxu0 0
    %1466 = vmatpush1.bf16.msra.mxu0 %v1391
    %1467 = vmatprep.subr.bf16.mxu0 0
    %1468 = vmatpush1.bf16.msra.mxu0 %v1392
    %1469 = vmatprep.subr.bf16.mxu0 0
    %1470 = vmatpush1.bf16.msra.mxu0 %v1393
    %1471 = vmatprep.subr.bf16.mxu0 0
    %1472 = vmatpush1.bf16.msra.mxu0 %v1394
    %1473 = vmatprep.subr.bf16.mxu0 0
    %1474 = vmatpush1.bf16.msra.mxu0 %v1395
    %1475 = vmatprep.subr.bf16.mxu0 0
    %1476 = vmatpush1.bf16.msra.mxu0 %v1396
    %1477 = vmatprep.mubr.bf16.mxu0 %v1158
    %1478 = vmatmul.mubr.bf16.gmra.mrb[0].mxu0 %v1157
    %v1479 = vpop.f32.mrb[0].mxu0
    %v1480 = vadd.f32 0.0, %v1479
    %v1481 = vpop.f32.mrb[0].mxu0
    %v1482 = vpop.f32.mrb[0].mxu0
    %v1483 = vadd.f32 0.0, %v1482
    %v1484 = vpop.f32.mrb[0].mxu0
    %1485 = vmatprep.mubr.bf16.mxu0 %v1162
    %1486 = vmatmul.mubr.bf16.gmra.mrb[0].mxu0 %v1161
    %v1487 = vpop.f32.mrb[0].mxu0
    %v1488 = vadd.f32 0.0, %v1487
    %v1489 = vpop.f32.mrb[0].mxu0
    %v1490 = vpop.f32.mrb[0].mxu0
    %v1491 = vadd.f32 0.0, %v1490
    %v1492 = vpop.f32.mrb[0].mxu0
    %1493 = vmatprep.mubr.bf16.mxu0 %v1166
    %1494 = vmatmul.mubr.bf16.gmra.mrb[0].mxu0 %v1165
    %v1495 = vpop.f32.mrb[0].mxu0
    %v1496 = vadd.f32 0.0, %v1495
    %v1497 = vpop.f32.mrb[0].mxu0
    %v1498 = vpop.f32.mrb[0].mxu0
    %v1499 = vadd.f32 0.0, %v1498
    %v1500 = vpop.f32.mrb[0].mxu0
    %1501 = vmatprep.mubr.bf16.mxu0 %v1170
    %1502 = vmatmul.mubr.bf16.gmra.mrb[0].mxu0 %v1169
    %v1503 = vpop.f32.mrb[0].mxu0
    %v1504 = vadd.f32 0.0, %v1503
    %v1505 = vpop.f32.mrb[0].mxu0
    %v1506 = vpop.f32.mrb[0].mxu0
    %v1507 = vadd.f32 0.0, %v1506
    %v1508 = vpop.f32.mrb[0].mxu0
    %1509 = vmatprep.mubr.bf16.mxu0 %v1174
    %1510 = vmatmul.mubr.bf16.gmra.mrb[0].mxu0 %v1173
    %v1511 = vpop.f32.mrb[0].mxu0
    %v1512 = vadd.f32 0.0, %v1511
    %v1513 = vpop.f32.mrb[0].mxu0
    %v1514 = vpop.f32.mrb[0].mxu0
    %v1515 = vadd.f32 0.0, %v1514
    %v1516 = vpop.f32.mrb[0].mxu0
    %1517 = vmatprep.mubr.bf16.mxu0 %v1178
    %1518 = vmatmul.mubr.bf16.gmra.mrb[0].mxu0 %v1177
    %v1519 = vpop.f32.mrb[0].mxu0
    %v1520 = vadd.f32 0.0, %v1519
    %v1521 = vpop.f32.mrb[0].mxu0
    %v1522 = vpop.f32.mrb[0].mxu0
    %v1523 = vadd.f32 0.0, %v1522
    %v1524 = vpop.f32.mrb[0].mxu0
    %1525 = vmatprep.mubr.bf16.mxu0 %v1182
    %1526 = vmatmul.mubr.bf16.gmra.mrb[0].mxu0 %v1181
    %v1527 = vpop.f32.mrb[0].mxu0
    %v1528 = vadd.f32 0.0, %v1527
    %v1529 = vpop.f32.mrb[0].mxu0
    %v1530 = vpop.f32.mrb[0].mxu0
    %v1531 = vadd.f32 0.0, %v1530
    %v1532 = vpop.f32.mrb[0].mxu0
    %1533 = vmatprep.mubr.bf16.mxu0 %v1186
    %1534 = vmatmul.mubr.bf16.gmra.mrb[0].mxu0 %v1185
    %v1535 = vpop.f32.mrb[0].mxu0
    %v1536 = vadd.f32 0.0, %v1535
    %v1537 = vpop.f32.mrb[0].mxu0
    %v1538 = vpop.f32.mrb[0].mxu0
    %v1539 = vadd.f32 0.0, %v1538
    %v1540 = vpop.f32.mrb[0].mxu0
    %1541 = vdwg.mxu0
    %1542 = vmatprep.subr.bf16.mxu0 0
    %1543 = vmatpush1.bf16.msra.mxu0 %v1397
    %1544 = vmatprep.subr.bf16.mxu0 0
    %1545 = vmatpush1.bf16.msra.mxu0 %v1398
    %1546 = vmatprep.subr.bf16.mxu0 0
    %1547 = vmatpush1.bf16.msra.mxu0 %v1399
    %1548 = vmatprep.subr.bf16.mxu0 0
    %1549 = vmatpush1.bf16.msra.mxu0 %v1400
    %1550 = vmatprep.subr.bf16.mxu0 0
    %1551 = vmatpush1.bf16.msra.mxu0 %v1401
    %1552 = vmatprep.subr.bf16.mxu0 0
    %1553 = vmatpush1.bf16.msra.mxu0 %v1402
    %1554 = vmatprep.subr.bf16.mxu0 0
    %1555 = vmatpush1.bf16.msra.mxu0 %v1403
    %1556 = vmatprep.subr.bf16.mxu0 0
    %1557 = vmatpush1.bf16.msra.mxu0 %v1404
    %1558 = vmatprep.subr.bf16.mxu0 0
    %1559 = vmatpush1.bf16.msra.mxu0 %v1405
    %1560 = vmatprep.subr.bf16.mxu0 0
    %1561 = vmatpush1.bf16.msra.mxu0 %v1406
    %1562 = vmatprep.subr.bf16.mxu0 0
    %1563 = vmatpush1.bf16.msra.mxu0 %v1407
    %1564 = vmatprep.subr.bf16.mxu0 0
    %1565 = vmatpush1.bf16.msra.mxu0 %v1408
    %1566 = vmatprep.subr.bf16.mxu0 0
    %1567 = vmatpush1.bf16.msra.mxu0 %v1409
    %1568 = vmatprep.subr.bf16.mxu0 0
    %1569 = vmatpush1.bf16.msra.mxu0 %v1410
    %1570 = vmatprep.subr.bf16.mxu0 0
    %1571 = vmatpush1.bf16.msra.mxu0 %v1411
    %1572 = vmatprep.subr.bf16.mxu0 0
    %1573 = vmatpush1.bf16.msra.mxu0 %v1412
    %1574 = vmatprep.mubr.bf16.mxu0 %v1160
    %1575 = vmatmul.mubr.bf16.gmra.mrb[0].mxu0 %v1159
    %v1576 = vpop.f32.mrb[0].mxu0
    %v1577 = vadd.f32 %v1480, %v1576
    %v1578 = vpop.f32.mrb[0].mxu0
    %v1579 = vpop.f32.mrb[0].mxu0
    %v1580 = vadd.f32 %v1483, %v1579
    %v1581 = vpop.f32.mrb[0].mxu0
    %1582 = vmatprep.mubr.bf16.mxu0 %v1164
    %1583 = vmatmul.mubr.bf16.gmra.mrb[0].mxu0 %v1163
    %v1584 = vpop.f32.mrb[0].mxu0
    %v1585 = vadd.f32 %v1488, %v1584
    %v1586 = vpop.f32.mrb[0].mxu0
    %v1587 = vpop.f32.mrb[0].mxu0
    %v1588 = vadd.f32 %v1491, %v1587
    %v1589 = vpop.f32.mrb[0].mxu0
    %1590 = vmatprep.mubr.bf16.mxu0 %v1168
    %1591 = vmatmul.mubr.bf16.gmra.mrb[0].mxu0 %v1167
    %v1592 = vpop.f32.mrb[0].mxu0
    %v1593 = vadd.f32 %v1496, %v1592
    %v1594 = vpop.f32.mrb[0].mxu0
    %v1595 = vpop.f32.mrb[0].mxu0
    %v1596 = vadd.f32 %v1499, %v1595
    %v1597 = vpop.f32.mrb[0].mxu0
    %1598 = vmatprep.mubr.bf16.mxu0 %v1172
    %1599 = vmatmul.mubr.bf16.gmra.mrb[0].mxu0 %v1171
    %v1600 = vpop.f32.mrb[0].mxu0
    %v1601 = vadd.f32 %v1504, %v1600
    %v1602 = vpop.f32.mrb[0].mxu0
    %v1603 = vpop.f32.mrb[0].mxu0
    %v1604 = vadd.f32 %v1507, %v1603
    %v1605 = vpop.f32.mrb[0].mxu0
    %1606 = vmatprep.mubr.bf16.mxu0 %v1176
    %1607 = vmatmul.mubr.bf16.gmra.mrb[0].mxu0 %v1175
    %v1608 = vpop.f32.mrb[0].mxu0
    %v1609 = vadd.f32 %v1512, %v1608
    %v1610 = vpop.f32.mrb[0].mxu0
    %v1611 = vpop.f32.mrb[0].mxu0
    %v1612 = vadd.f32 %v1515, %v1611
    %v1613 = vpop.f32.mrb[0].mxu0
    %1614 = vmatprep.mubr.bf16.mxu0 %v1180
    %1615 = vmatmul.mubr.bf16.gmra.mrb[0].mxu0 %v1179
    %v1616 = vpop.f32.mrb[0].mxu0
    %v1617 = vadd.f32 %v1520, %v1616
    %v1618 = vpop.f32.mrb[0].mxu0
    %v1619 = vpop.f32.mrb[0].mxu0
    %v1620 = vadd.f32 %v1523, %v1619
    %v1621 = vpop.f32.mrb[0].mxu0
    %1622 = vmatprep.mubr.bf16.mxu0 %v1184
    %1623 = vmatmul.mubr.bf16.gmra.mrb[0].mxu0 %v1183
    %v1624 = vpop.f32.mrb[0].mxu0
    %v1625 = vadd.f32 %v1528, %v1624
    %v1626 = vpop.f32.mrb[0].mxu0
    %v1627 = vpop.f32.mrb[0].mxu0
    %v1628 = vadd.f32 %v1531, %v1627
    %v1629 = vpop.f32.mrb[0].mxu0
    %1630 = vmatprep.mubr.bf16.mxu0 %v1188
    %1631 = vmatmul.mubr.bf16.gmra.mrb[0].mxu0 %v1187
    %v1632 = vpop.f32.mrb[0].mxu0
    %v1633 = vadd.f32 %v1536, %v1632
    %v1634 = vpop.f32.mrb[0].mxu0
    %v1635 = vpop.f32.mrb[0].mxu0
    %v1636 = vadd.f32 %v1539, %v1635
    %v1637 = vpop.f32.mrb[0].mxu0
    %1638 = vdwg.mxu0
    %v1639 = vld [vmem:[%s5] sm:$0x1]
    %v1640 = vld [vmem:[%s6] sm:$0x1]
    %v1641 = vadd.f32 %v1577, %v1580
    %v1642 = vadd.f32 %v1641, %v1585
    %v1643 = vadd.f32 %v1642, %v1588
    %v1644 = vadd.f32 %v1643, %v1593
    %v1645 = vadd.f32 %v1644, %v1596
    %v1646 = vadd.f32 %v1645, %v1601
    %v1647 = vadd.f32 %v1646, %v1604
    %v1648 = vadd.f32 %v1647, %v1609
    %v1649 = vadd.f32 %v1648, %v1612
    %v1650 = vadd.f32 %v1649, %v1617
    %v1651 = vadd.f32 %v1650, %v1620
    %v1652 = vadd.f32 %v1651, %v1625
    %v1653 = vadd.f32 %v1652, %v1628
    %v1654 = vadd.f32 %v1653, %v1633
    %v1655 = vadd.f32 %v1654, %v1636
    %v1656 = vrot.slane %v1655, 4
    %v1657 = vadd.f32 %v1655, %v1656
    %v1658 = vrot.slane %v1657, 2
    %v1659 = vadd.f32 %v1657, %v1658
    %v1660 = vrot.slane %v1659, 1
    %v1661 = vadd.f32 %v1659, %v1660
    %v1662 = vmul.f32 %v1661, 0.0078125
    %v1663 = vsub.f32 %v1577, %v1662
    %v1664 = vsub.f32 %v1580, %v1662
    %v1665 = vsub.f32 %v1585, %v1662
    %v1666 = vsub.f32 %v1588, %v1662
    %v1667 = vsub.f32 %v1593, %v1662
    %v1668 = vsub.f32 %v1596, %v1662
    %v1669 = vsub.f32 %v1601, %v1662
    %v1670 = vsub.f32 %v1604, %v1662
    %v1671 = vsub.f32 %v1609, %v1662
    %v1672 = vsub.f32 %v1612, %v1662
    %v1673 = vsub.f32 %v1617, %v1662
    %v1674 = vsub.f32 %v1620, %v1662
    %v1675 = vsub.f32 %v1625, %v1662
    %v1676 = vsub.f32 %v1628, %v1662
    %v1677 = vsub.f32 %v1633, %v1662
    %v1678 = vsub.f32 %v1636, %v1662
    %v1679 = vmul.f32 %v1663, %v1663
    %v1680 = vmul.f32 %v1664, %v1664
    %v1681 = vmul.f32 %v1665, %v1665
    %v1682 = vmul.f32 %v1666, %v1666
    %v1683 = vmul.f32 %v1667, %v1667
    %v1684 = vmul.f32 %v1668, %v1668
    %v1685 = vmul.f32 %v1669, %v1669
    %v1686 = vmul.f32 %v1670, %v1670
    %v1687 = vmul.f32 %v1671, %v1671
    %v1688 = vmul.f32 %v1672, %v1672
    %v1689 = vmul.f32 %v1673, %v1673
    %v1690 = vmul.f32 %v1674, %v1674
    %v1691 = vmul.f32 %v1675, %v1675
    %v1692 = vmul.f32 %v1676, %v1676
    %v1693 = vmul.f32 %v1677, %v1677
    %v1694 = vmul.f32 %v1678, %v1678
    %v1695 = vadd.f32 %v1679, %v1680
    %v1696 = vadd.f32 %v1695, %v1681
    %v1697 = vadd.f32 %v1696, %v1682
    %v1698 = vadd.f32 %v1697, %v1683
    %v1699 = vadd.f32 %v1698, %v1684
    %v1700 = vadd.f32 %v1699, %v1685
    %v1701 = vadd.f32 %v1700, %v1686
    %v1702 = vadd.f32 %v1701, %v1687
    %v1703 = vadd.f32 %v1702, %v1688
    %v1704 = vadd.f32 %v1703, %v1689
    %v1705 = vadd.f32 %v1704, %v1690
    %v1706 = vadd.f32 %v1705, %v1691
    %v1707 = vadd.f32 %v1706, %v1692
    %v1708 = vadd.f32 %v1707, %v1693
    %v1709 = vadd.f32 %v1708, %v1694
    %v1710 = vrot.slane %v1709, 4
    %v1711 = vadd.f32 %v1709, %v1710
    %v1712 = vrot.slane %v1711, 2
    %v1713 = vadd.f32 %v1711, %v1712
    %v1714 = vrot.slane %v1713, 1
    %v1715 = vadd.f32 %v1713, %v1714
    %v1716 = vmul.f32 %v1715, 0.0078125
    %v1717 = vadd.f32 %v1716, 1e-05
    %v1718 = vrsqrt.pop %v1717
    %v1719 = vmul.f32 %v1639, %v1718
    %v1721 = vlaneseq
    %v1722 = vshrl.u32 %v1721, 7
    %v1723 = vsub.s32 0, %v1722
    %v1724 = vrot.slane %v1719, %v1723
    %v1726 = vmul.f32 %v1663, %v1724
    %v1727 = vmul.f32 %v1664, %v1724
    %v1728 = vmul.f32 %v1665, %v1724
    %v1729 = vmul.f32 %v1666, %v1724
    %v1730 = vmul.f32 %v1667, %v1724
    %v1731 = vmul.f32 %v1668, %v1724
    %v1732 = vmul.f32 %v1669, %v1724
    %v1733 = vmul.f32 %v1670, %v1724
    %v1734 = vmul.f32 %v1671, %v1724
    %v1735 = vmul.f32 %v1672, %v1724
    %v1736 = vmul.f32 %v1673, %v1724
    %v1737 = vmul.f32 %v1674, %v1724
    %v1738 = vmul.f32 %v1675, %v1724
    %v1739 = vmul.f32 %v1676, %v1724
    %v1740 = vmul.f32 %v1677, %v1724
    %v1741 = vmul.f32 %v1678, %v1724
    %v1743 = vlaneseq
    %v1744 = vshrl.u32 %v1743, 7
    %v1745 = vsub.s32 0, %v1744
    %v1746 = vrot.slane %v1640, %v1745
    %v1748 = vadd.f32 %v1726, %v1746
    %v1749 = vadd.f32 %v1727, %v1746
    %v1750 = vadd.f32 %v1728, %v1746
    %v1751 = vadd.f32 %v1729, %v1746
    %v1752 = vadd.f32 %v1730, %v1746
    %v1753 = vadd.f32 %v1731, %v1746
    %v1754 = vadd.f32 %v1732, %v1746
    %v1755 = vadd.f32 %v1733, %v1746
    %v1756 = vadd.f32 %v1734, %v1746
    %v1757 = vadd.f32 %v1735, %v1746
    %v1758 = vadd.f32 %v1736, %v1746
    %v1759 = vadd.f32 %v1737, %v1746
    %v1760 = vadd.f32 %v1738, %v1746
    %v1761 = vadd.f32 %v1739, %v1746
    %v1762 = vadd.f32 %v1740, %v1746
    %v1763 = vadd.f32 %v1741, %v1746
    %v1764 = vmax.f32 %v1748, 0.0
    %v1765 = vmax.f32 %v1749, 0.0
    %v1766 = vmax.f32 %v1750, 0.0
    %v1767 = vmax.f32 %v1751, 0.0
    %v1768 = vmax.f32 %v1752, 0.0
    %v1769 = vmax.f32 %v1753, 0.0
    %v1770 = vmax.f32 %v1754, 0.0
    %v1771 = vmax.f32 %v1755, 0.0
    %v1772 = vmax.f32 %v1756, 0.0
    %v1773 = vmax.f32 %v1757, 0.0
    %v1774 = vmax.f32 %v1758, 0.0
    %v1775 = vmax.f32 %v1759, 0.0
    %v1776 = vmax.f32 %v1760, 0.0
    %v1777 = vmax.f32 %v1761, 0.0
    %v1778 = vmax.f32 %v1762, 0.0
    %v1779 = vmax.f32 %v1763, 0.0
    %1780 = vst [vmem:[#allocation9] sm:$0xff] %v1764
    %1781 = vst [vmem:[#allocation9 + $0x8] sm:$0xff] %v1765
    %1782 = vst [vmem:[#allocation9 + $0x10] sm:$0xff] %v1766
    %1783 = vst [vmem:[#allocation9 + $0x18] sm:$0xff] %v1767
    %1784 = vst [vmem:[#allocation9 + $0x20] sm:$0xff] %v1768
    %1785 = vst [vmem:[#allocation9 + $0x28] sm:$0xff] %v1769
    %1786 = vst [vmem:[#allocation9 + $0x30] sm:$0xff] %v1770
    %1787 = vst [vmem:[#allocation9 + $0x38] sm:$0xff] %v1771
    %1788 = vst [vmem:[#allocation9 + $0x40] sm:$0xff] %v1772
    %1789 = vst [vmem:[#allocation9 + $0x48] sm:$0xff] %v1773
    %1790 = vst [vmem:[#allocation9 + $0x50] sm:$0xff] %v1774
    %1791 = vst [vmem:[#allocation9 + $0x58] sm:$0xff] %v1775
    %1792 = vst [vmem:[#allocation9 + $0x60] sm:$0xff] %v1776
    %1793 = vst [vmem:[#allocation9 + $0x68] sm:$0xff] %v1777
    %1794 = vst [vmem:[#allocation9 + $0x70] sm:$0xff] %v1778
    %1795 = vst [vmem:[#allocation9 + $0x78] sm:$0xff] %v1779
    // Predicated region
    $region46: #{expander_forward.1} parent=1 // pred_check
      _
    $region47: #{expander_forward.1} parent=1 // pred_check_branch
      %1797 = sbr.rel (0) target = $region49
    $region48: #{expander_forward.1} parent=1 // pred_region
      %s1799 = ssub.s32 2048, 2048
      %1800 = vsyncadd [#allocation5], %s1799
      %s1801 = sshll.u32 [#allocation9], 4
      %s1802 = int_to_ptr.vmem [resolvable:$true] %s1801
      %1807 = dma.vmem_to_hbm [thread:$0]  %s1802, 2048, %s7, [#allocation5], 128, 128, 8
    $region49: #{expander_forward.1} parent=1 // pred_fallthru
      _
    // Predicated region
    $region50: #{expander_forward.1} parent=1 // pred_check
      _
    $region51: #{expander_forward.1} parent=1 // pred_check_branch
      %1809 = sbr.rel (0) target = $region53
    $region52: #{expander_forward.1} parent=1 // pred_region
      %1810 = dma.done [#allocation5], 2048
    $region53: #{expander_forward.1} parent=1 // pred_fallthru
      _
    %1811 = vsyncpa [#allocation4], 1
    %1812 = vsyncpa [#allocation7], 1
    %1813 = vsyncpa [#allocation5], 1

</llo_original>
